<compile_context>
chip_gen: v6e
topology: v6e:2x2x1
jax: 0.10.0
libtpu: 0.0.40
codegen_flags: <defaults>
</compile_context>

<pallas_src>
import math

import jax
import jax.numpy as jnp
from jax import lax
from jax.experimental import pallas as pl
from jax.experimental.pallas import tpu as pltpu


# ----------------------------- configuration ---------------------------------
B = 2            # batch
C_IN = 3         # image channels
IMG = 16         # image H = W
PATCH = 4        # patchify "conv" kernel = stride
T = (IMG // PATCH) ** 2          # num_image_tokens = 16
P_DIM = C_IN * PATCH * PATCH     # flattened patch dim = 48
D_LAT = 16                       # VQ latent dim
K_CODE = 32                      # num_codebook_vectors
MASK_TOKEN_ID = K_CODE           # configs['num_codebook_vectors']
D_MODEL = 32                     # transformer hidden
N_HEAD = 2
D_HEAD = D_MODEL // N_HEAD
D_FF = 4 * D_MODEL
BT = B * T                       # 32 rows (sublane axis inside the kernel)
VOCAB = K_CODE + 1               # 33 (codes + mask token)
VOCAB_PAD = 128                  # padded vocab for the one-hot contraction (lane-aligned)
LOGIT_PAD = 128                  # padded logits width -> lane-dense stores

_VMEM_SPEC = pl.BlockSpec(memory_space=pltpu.MemorySpace.VMEM)


# ------------------------------ kernel helpers --------------------------------
def _layernorm(x, g, b, eps=1e-5):
    # x: (BT, D) f32, g/b: (1, D) f32
    mu = jnp.mean(x, axis=-1, keepdims=True)
    xc = x - mu
    var = jnp.mean(xc * xc, axis=-1, keepdims=True)
    return xc * lax.rsqrt(var + eps) * g + b


# ------------------------------ fused kernel ----------------------------------
def maskgit_kernel(patch_ref, mask_ref,
                   vqw_ref, vqb_ref,
                   tok_ref, pos_ref,
                   ln1g_ref, ln1b_ref,
                   wq_ref, bq_ref, wk_ref, bk_ref, wv_ref, bv_ref,
                   wo_ref, bo_ref,
                   ln2g_ref, ln2b_ref,
                   w1_ref, b1_ref, w2_ref, b2_ref,
                   lnfg_ref, lnfb_ref,
                   wh_ref, bh_ref,
                   logits_ref, idx_ref):
    # ---- VQ encode (folded): dist = ||c||^2 - 2 * (enc(x) . c), argmin over codes ----
    # vqw = -2 * enc_w @ codebook^T, vqb = ||c||^2 - 2 * enc_b @ codebook^T (pre-folded).
    dist = vqb_ref[...] + jnp.dot(patch_ref[...], vqw_ref[...],
                                  preferred_element_type=jnp.float32)          # (BT, K)
    dmin = jnp.min(dist, axis=-1, keepdims=True)
    lane = lax.broadcasted_iota(jnp.int32, dist.shape, 1)
    idx = jnp.min(jnp.where(dist == dmin, lane, K_CODE),
                  axis=-1, keepdims=True).astype(jnp.int32)                    # (BT, 1)
    idx_ref[...] = idx

    # ---- MVTM masking + token embedding (one-hot matmul over padded vocab) ----
    midx = jnp.where(mask_ref[...] != 0, MASK_TOKEN_ID, idx)                   # (BT, 1)
    onehot = (midx == lax.broadcasted_iota(jnp.int32, (BT, VOCAB_PAD), 1)
              ).astype(jnp.bfloat16)                                           # (BT, 128)
    x = jnp.dot(onehot, tok_ref[...], preferred_element_type=jnp.float32)      # (BT, D)
    x = x + pos_ref[...]                                                       # pos pre-tiled (BT, D)

    # ---- self-attention block (per-head weights pre-split, no lane slicing/concat) ----
    h1 = _layernorm(x, ln1g_ref[...], ln1b_ref[...])
    h1b = h1.astype(jnp.bfloat16)
    scale = 1.0 / math.sqrt(D_HEAD)
    attn_proj = jnp.zeros((BT, D_MODEL), jnp.float32)
    for hh in range(N_HEAD):                                                   # static loop (N_HEAD=2)
        q = jnp.dot(h1b, wq_ref[hh], preferred_element_type=jnp.float32) + bq_ref[hh]   # (BT, Dh)
        k = jnp.dot(h1b, wk_ref[hh], preferred_element_type=jnp.float32) + bk_ref[hh]
        v = jnp.dot(h1b, wv_ref[hh], preferred_element_type=jnp.float32) + bv_ref[hh]
        q3 = q.reshape(B, T, D_HEAD).astype(jnp.bfloat16)                      # leading-dim split only
        k3 = k.reshape(B, T, D_HEAD).astype(jnp.bfloat16)
        v3 = v.reshape(B, T, D_HEAD).astype(jnp.bfloat16)
        s = jnp.einsum('bqd,bkd->bqk', q3, k3,
                       preferred_element_type=jnp.float32) * scale             # (B, T, T) f32
        s = s - jnp.max(s, axis=-1, keepdims=True)
        p = jnp.exp(s)
        p = p * pl.reciprocal(jnp.sum(p, axis=-1, keepdims=True), approx=True)
        o = jnp.einsum('bqk,bkd->bqd', p.astype(jnp.bfloat16), v3,
                       preferred_element_type=jnp.float32)                     # (B, T, Dh)
        # sum per-head contribution through wo's corresponding row-block (replaces concat)
        attn_proj = attn_proj + jnp.dot(o.reshape(BT, D_HEAD).astype(jnp.bfloat16),
                                        wo_ref[hh], preferred_element_type=jnp.float32)
    x = x + attn_proj + bo_ref[...]

    # ---- MLP block ----
    h2 = _layernorm(x, ln2g_ref[...], ln2b_ref[...])
    ff = jnp.dot(h2.astype(jnp.bfloat16), w1_ref[...],
                 preferred_element_type=jnp.float32) + b1_ref[...]             # (BT, D_FF)
    # TODO(synk): torch nn.GELU defaults to exact erf; tanh approximation used here.
    ff = jax.nn.gelu(ff, approximate=True)
    x = x + jnp.dot(ff.astype(jnp.bfloat16), w2_ref[...],
                    preferred_element_type=jnp.float32) + b2_ref[...]

    # ---- head (padded to 128 output lanes -> unmasked lane-dense stores) ----
    xf = _layernorm(x, lnfg_ref[...], lnfb_ref[...])
    logits_ref[...] = jnp.dot(xf.astype(jnp.bfloat16), wh_ref[...],
                              preferred_element_type=jnp.float32) + bh_ref[...]


# ------------------------------- forward (jitted) ------------------------------
@jax.jit
def maskgit_forward(x, kp, rng):
    """Returns (logits, z_indices), mirroring MaskGit.forward."""
    # NCHW -> patch rows (B*T, C*p*p): synthetic patchify "conv" with kernel = stride = PATCH
    g = IMG // PATCH
    patches = x.reshape(B, C_IN, g, PATCH, g, PATCH)
    patches = patches.transpose(0, 2, 4, 1, 3, 5).reshape(BT, P_DIM)

    # MVTM mask (host np.random in torch -> jax.random inside the jit here)
    k_ratio, k_bern = jax.random.split(rng)
    mask_ratio = jax.random.uniform(k_ratio, (), minval=0.1, maxval=0.9)
    mask = jax.random.bernoulli(k_bern, p=mask_ratio, shape=(BT, 1)).astype(jnp.int32)

    args = (patches, mask,
            kp['vq_w'], kp['vq_b'],
            kp['tok_emb'], kp['pos_emb'],
            kp['ln1_g'], kp['ln1_b'],
            kp['wq'], kp['bq'], kp['wk'], kp['bk'], kp['wv'], kp['bv'],
            kp['wo'], kp['bo'],
            kp['ln2_g'], kp['ln2_b'],
            kp['w1'], kp['b1'], kp['w2'], kp['b2'],
            kp['lnf_g'], kp['lnf_b'],
            kp['wh'], kp['bh'])

    logits_pad, z_idx = pl.pallas_call(
        maskgit_kernel,
        out_shape=(jax.ShapeDtypeStruct((BT, LOGIT_PAD), jnp.float32),
                   jax.ShapeDtypeStruct((BT, 1), jnp.int32)),
        in_specs=[_VMEM_SPEC] * len(args),
        out_specs=(_VMEM_SPEC, _VMEM_SPEC),
    )(*args)

    logits = logits_pad[:, :K_CODE].reshape(B, T, K_CODE)
    z_indices = z_idx.reshape(B, T)
    return logits, z_indices


# ------------------------------ param construction ----------------------------
def make_params(key):
    """PyTorch-layout synthetic parameters."""
    def nrm(k, shape, scale=0.02):
        return (scale * jax.random.normal(k, shape)).astype(jnp.float32)
    ks = jax.random.split(key, 20)
    return {
        # synthetic VQGAN encoder (patchify conv) + codebook
        'enc_w': nrm(ks[0], (P_DIM, D_LAT), 0.1),
        'enc_b': jnp.zeros((1, D_LAT), jnp.float32),
        'codebook': nrm(ks[1], (K_CODE, D_LAT), 0.1),
        # BidirectionalTransformer (1 layer, 2 heads)
        'tok_emb': nrm(ks[2], (VOCAB, D_MODEL)),
        'pos_emb': nrm(ks[3], (T, D_MODEL)),
        'ln1_g': jnp.ones((1, D_MODEL), jnp.float32),
        'ln1_b': jnp.zeros((1, D_MODEL), jnp.float32),
        'wq': nrm(ks[4], (D_MODEL, D_MODEL)), 'bq': jnp.zeros((1, D_MODEL), jnp.float32),
        'wk': nrm(ks[5], (D_MODEL, D_MODEL)), 'bk': jnp.zeros((1, D_MODEL), jnp.float32),
        'wv': nrm(ks[6], (D_MODEL, D_MODEL)), 'bv': jnp.zeros((1, D_MODEL), jnp.float32),
        'wo': nrm(ks[7], (D_MODEL, D_MODEL)), 'bo': jnp.zeros((1, D_MODEL), jnp.float32),
        'ln2_g': jnp.ones((1, D_MODEL), jnp.float32),
        'ln2_b': jnp.zeros((1, D_MODEL), jnp.float32),
        'w1': nrm(ks[8], (D_MODEL, D_FF)), 'b1': jnp.zeros((1, D_FF), jnp.float32),
        'w2': nrm(ks[9], (D_FF, D_MODEL)), 'b2': jnp.zeros((1, D_MODEL), jnp.float32),
        'lnf_g': jnp.ones((1, D_MODEL), jnp.float32),
        'lnf_b': jnp.zeros((1, D_MODEL), jnp.float32),
        'wh': nrm(ks[10], (D_MODEL, K_CODE)), 'bh': jnp.zeros((1, K_CODE), jnp.float32),
    }


def prepare_kernel_params(p):
    """One-time re-layout of params for the kernel (head split, padding, folding, bf16)."""
    bf16 = jnp.bfloat16
    # VQ fold: argmin ||z-c||^2 == argmin (||c||^2 - 2 z.c); fold enc weight/bias into it.
    cb = p['codebook']                                           # (K, D_LAT)
    cb_t = cb.T                                                  # (D_LAT, K)
    vq_w = (-2.0) * (p['enc_w'] @ cb_t)                          # (P_DIM, K)
    cb_sq = jnp.sum(cb * cb, axis=-1)[None, :]                   # (1, K)
    vq_b = cb_sq - 2.0 * (p['enc_b'] @ cb_t)                     # (1, K)

    # vocab-padded token embedding (rows >= VOCAB are never selected)
    tok_pad = jnp.zeros((VOCAB_PAD, D_MODEL), jnp.float32).at[:VOCAB].set(p['tok_emb'])

    def split_cols(w):   # (D, D) -> (H, D, Dh): head hh == w[:, hh*Dh:(hh+1)*Dh]
        return w.reshape(D_MODEL, N_HEAD, D_HEAD).transpose(1, 0, 2)

    def split_bias(b):   # (1, D) -> (H, 1, Dh)
        return b.reshape(1, N_HEAD, D_HEAD).transpose(1, 0, 2)

    # lane-padded head (extra columns are zero; sliced off in the wrapper)
    wh_pad = jnp.zeros((D_MODEL, LOGIT_PAD), jnp.float32).at[:, :K_CODE].set(p['wh'])
    bh_pad = jnp.zeros((1, LOGIT_PAD), jnp.float32).at[:, :K_CODE].set(p['bh'])

    return {
        'vq_w': vq_w.astype(jnp.float32), 'vq_b': vq_b.astype(jnp.float32),
        'tok_emb': tok_pad.astype(bf16),
        'pos_emb': jnp.tile(p['pos_emb'], (B, 1)).astype(jnp.float32),        # (BT, D)
        'ln1_g': p['ln1_g'], 'ln1_b': p['ln1_b'],
        'wq': split_cols(p['wq']).astype(bf16), 'bq': split_bias(p['bq']),
        'wk': split_cols(p['wk']).astype(bf16), 'bk': split_bias(p['bk']),
        'wv': split_cols(p['wv']).astype(bf16), 'bv': split_bias(p['bv']),
        'wo': p['wo'].reshape(N_HEAD, D_HEAD, D_MODEL).astype(bf16),          # row-blocks
        'bo': p['bo'],
        'ln2_g': p['ln2_g'], 'ln2_b': p['ln2_b'],
        'w1': p['w1'].astype(bf16), 'b1': p['b1'],
        'w2': p['w2'].astype(bf16), 'b2': p['b2'],
        'lnf_g': p['lnf_g'], 'lnf_b': p['lnf_b'],
        'wh': wh_pad.astype(bf16), 'bh': bh_pad,
    }


# ------------------------------------ main ------------------------------------
if __name__ == "__main__":
    root = jax.random.PRNGKey(0)
    k_params, k_input, k_mask = jax.random.split(root, 3)

    params = make_params(k_params)
    kparams = prepare_kernel_params(params)
    x = jax.random.normal(k_input, (B, C_IN, IMG, IMG), dtype=jnp.float32)  # NCHW

    logits, z_indices = maskgit_forward(x, kparams, k_mask)
    logits = jax.block_until_ready(logits)
    z_indices = jax.block_until_ready(z_indices)

    assert logits.shape == (B, T, K_CODE) and logits.dtype == jnp.float32
    assert z_indices.shape == (B, T) and z_indices.dtype == jnp.int32
    assert bool(jnp.all(jnp.isfinite(logits)))
    assert bool(jnp.all((z_indices >= 0) & (z_indices < K_CODE)))
    print("KERNEL_OK")
</pallas_src>

<mosaic_0001>
module attributes {stable_mosaic.version = 11 : i64} {
  func.func @maskgit_kernel(%arg0: memref<32x48xf32, #tpu.memory_space<vmem>>, %arg1: memref<32x1xi32, #tpu.memory_space<vmem>>, %arg2: memref<48x32xf32, #tpu.memory_space<vmem>>, %arg3: memref<1x32xf32, #tpu.memory_space<vmem>>, %arg4: memref<128x32xbf16, #tpu.memory_space<vmem>>, %arg5: memref<32x32xf32, #tpu.memory_space<vmem>>, %arg6: memref<1x32xf32, #tpu.memory_space<vmem>>, %arg7: memref<1x32xf32, #tpu.memory_space<vmem>>, %arg8: memref<2x32x16xbf16, #tpu.memory_space<vmem>>, %arg9: memref<2x1x16xf32, #tpu.memory_space<vmem>>, %arg10: memref<2x32x16xbf16, #tpu.memory_space<vmem>>, %arg11: memref<2x1x16xf32, #tpu.memory_space<vmem>>, %arg12: memref<2x32x16xbf16, #tpu.memory_space<vmem>>, %arg13: memref<2x1x16xf32, #tpu.memory_space<vmem>>, %arg14: memref<2x16x32xbf16, #tpu.memory_space<vmem>>, %arg15: memref<1x32xf32, #tpu.memory_space<vmem>>, %arg16: memref<1x32xf32, #tpu.memory_space<vmem>>, %arg17: memref<1x32xf32, #tpu.memory_space<vmem>>, %arg18: memref<32x128xbf16, #tpu.memory_space<vmem>>, %arg19: memref<1x128xf32, #tpu.memory_space<vmem>>, %arg20: memref<128x32xbf16, #tpu.memory_space<vmem>>, %arg21: memref<1x32xf32, #tpu.memory_space<vmem>>, %arg22: memref<1x32xf32, #tpu.memory_space<vmem>>, %arg23: memref<1x32xf32, #tpu.memory_space<vmem>>, %arg24: memref<32x128xbf16, #tpu.memory_space<vmem>>, %arg25: memref<1x128xf32, #tpu.memory_space<vmem>>, %arg26: memref<32x128xf32, #tpu.memory_space<vmem>>, %arg27: memref<32x1xi32, #tpu.memory_space<vmem>>) attributes {dimension_semantics = [], scalar_prefetch = 0 : i64, scratch_operands = 0 : i64, tpu.core_type = #tpu.core_type<tc>} {
    %c0 = arith.constant 0 : index
    %c0_0 = arith.constant 0 : index
    %0 = vector.load %arg3[%c0, %c0_0] : memref<1x32xf32, #tpu.memory_space<vmem>>, vector<1x32xf32>
    %c0_1 = arith.constant 0 : index
    %c0_2 = arith.constant 0 : index
    %1 = vector.load %arg0[%c0_1, %c0_2] : memref<32x48xf32, #tpu.memory_space<vmem>>, vector<32x48xf32>
    %c0_3 = arith.constant 0 : index
    %c0_4 = arith.constant 0 : index
    %2 = vector.load %arg2[%c0_3, %c0_4] : memref<48x32xf32, #tpu.memory_space<vmem>>, vector<48x32xf32>
    %cst = arith.constant dense<0.000000e+00> : vector<32x32xf32>
    %3 = tpu.matmul %1, %2, %cst {dimension_numbers = #tpu.dot_dimension_numbers<[1], [0], [0], [1], [0, 0, 1, 1], [], []>} : vector<32x48xf32>, vector<48x32xf32>, vector<32x32xf32> -> vector<32x32xf32>
    %4 = vector.broadcast %0 : vector<1x32xf32> to vector<32x32xf32>
    %5 = arith.addf %4, %3 : vector<32x32xf32>
    %cst_5 = arith.constant dense<0x7F800000> : vector<32xf32>
    %6 = vector.multi_reduction <minimumf>, %5, %cst_5 [1] : vector<32x32xf32> to vector<32xf32>
    %7 = vector.shape_cast %6 : vector<32xf32> to vector<32x1xf32>
    %8 = tpu.iota {dimensions = array<i32: 1>} : vector<32x32xi32>
    %9 = vector.broadcast %7 : vector<32x1xf32> to vector<32x32xf32>
    %10 = arith.cmpf oeq, %5, %9 : vector<32x32xf32>
    %c32_i32 = arith.constant 32 : i32
    %11 = vector.broadcast %c32_i32 : i32 to vector<32x32xi32>
    %12 = arith.select %10, %8, %11 : vector<32x32xi1>, vector<32x32xi32>
    %cst_6 = arith.constant dense<2147483647> : vector<32xi32>
    %13 = vector.multi_reduction <minsi>, %12, %cst_6 [1] : vector<32x32xi32> to vector<32xi32>
    %14 = vector.shape_cast %13 : vector<32xi32> to vector<32x1xi32>
    %c0_7 = arith.constant 0 : index
    %c0_8 = arith.constant 0 : index
    %15 = vector.load %arg27[%c0_7, %c0_8] : memref<32x1xi32, #tpu.memory_space<vmem>>, vector<32x1xi32>
    tpu.vector_store %arg27[%c0_7, %c0_8], %14 {strides = array<i32>} : memref<32x1xi32, #tpu.memory_space<vmem>>, vector<32x1xi32>,
    %c0_9 = arith.constant 0 : index
    %c0_10 = arith.constant 0 : index
    %16 = vector.load %arg1[%c0_9, %c0_10] : memref<32x1xi32, #tpu.memory_space<vmem>>, vector<32x1xi32>
    %c0_i32 = arith.constant 0 : i32
    %17 = vector.broadcast %c0_i32 : i32 to vector<32x1xi32>
    %18 = arith.cmpi ne, %16, %17 : vector<32x1xi32>
    %c32_i32_11 = arith.constant 32 : i32
    %19 = vector.broadcast %c32_i32_11 : i32 to vector<32x1xi32>
    %20 = arith.select %18, %19, %14 : vector<32x1xi1>, vector<32x1xi32>
    %21 = tpu.iota {dimensions = array<i32: 1>} : vector<32x128xi32>
    %22 = vector.broadcast %20 : vector<32x1xi32> to vector<32x128xi32>
    %23 = arith.cmpi eq, %22, %21 : vector<32x128xi32>
    %24 = arith.extui %23 : vector<32x128xi1> to vector<32x128xi32>
    %25 = arith.sitofp %24 : vector<32x128xi32> to vector<32x128xf32>
    %26 = arith.truncf %25 : vector<32x128xf32> to vector<32x128xbf16>
    %c0_12 = arith.constant 0 : index
    %c0_13 = arith.constant 0 : index
    %27 = vector.load %arg4[%c0_12, %c0_13] : memref<128x32xbf16, #tpu.memory_space<vmem>>, vector<128x32xbf16>
    %cst_14 = arith.constant dense<0.000000e+00> : vector<32x32xf32>
    %28 = tpu.matmul %26, %27, %cst_14 {dimension_numbers = #tpu.dot_dimension_numbers<[1], [0], [0], [1], [0, 0, 1, 1], [], []>} : vector<32x128xbf16>, vector<128x32xbf16>, vector<32x32xf32> -> vector<32x32xf32>
    %c0_15 = arith.constant 0 : index
    %c0_16 = arith.constant 0 : index
    %29 = vector.load %arg5[%c0_15, %c0_16] : memref<32x32xf32, #tpu.memory_space<vmem>>, vector<32x32xf32>
    %30 = arith.addf %28, %29 : vector<32x32xf32>
    %c0_17 = arith.constant 0 : index
    %c0_18 = arith.constant 0 : index
    %31 = vector.load %arg6[%c0_17, %c0_18] : memref<1x32xf32, #tpu.memory_space<vmem>>, vector<1x32xf32>
    %c0_19 = arith.constant 0 : index
    %c0_20 = arith.constant 0 : index
    %32 = vector.load %arg7[%c0_19, %c0_20] : memref<1x32xf32, #tpu.memory_space<vmem>>, vector<1x32xf32>
    %cst_21 = arith.constant dense<0.000000e+00> : vector<32xf32>
    %33 = vector.multi_reduction <add>, %30, %cst_21 [1] : vector<32x32xf32> to vector<32xf32>
    %34 = vector.shape_cast %33 : vector<32xf32> to vector<32x1xf32>
    %cst_22 = arith.constant 3.200000e+01 : f32
    %35 = vector.broadcast %cst_22 : f32 to vector<32x1xf32>
    %36 = arith.divf %34, %35 : vector<32x1xf32>
    %37 = vector.broadcast %36 : vector<32x1xf32> to vector<32x32xf32>
    %38 = arith.subf %30, %37 : vector<32x32xf32>
    %39 = arith.mulf %38, %38 : vector<32x32xf32>
    %cst_23 = arith.constant dense<0.000000e+00> : vector<32xf32>
    %40 = vector.multi_reduction <add>, %39, %cst_23 [1] : vector<32x32xf32> to vector<32xf32>
    %41 = vector.shape_cast %40 : vector<32xf32> to vector<32x1xf32>
    %cst_24 = arith.constant 3.200000e+01 : f32
    %42 = vector.broadcast %cst_24 : f32 to vector<32x1xf32>
    %43 = arith.divf %41, %42 : vector<32x1xf32>
    %cst_25 = arith.constant 9.99999974E-6 : f32
    %44 = vector.broadcast %cst_25 : f32 to vector<32x1xf32>
    %45 = arith.addf %43, %44 : vector<32x1xf32>
    %46 = math.rsqrt %45 : vector<32x1xf32>
    %47 = vector.broadcast %46 : vector<32x1xf32> to vector<32x32xf32>
    %48 = arith.mulf %38, %47 : vector<32x32xf32>
    %49 = vector.broadcast %31 : vector<1x32xf32> to vector<32x32xf32>
    %50 = arith.mulf %48, %49 : vector<32x32xf32>
    %51 = vector.broadcast %32 : vector<1x32xf32> to vector<32x32xf32>
    %52 = arith.addf %50, %51 : vector<32x32xf32>
    %53 = arith.truncf %52 : vector<32x32xf32> to vector<32x32xbf16>
    %cst_26 = arith.constant 0.000000e+00 : f32
    %54 = vector.broadcast %cst_26 : f32 to vector<32x32xf32>
    %c0_27 = arith.constant 0 : index
    %c0_28 = arith.constant 0 : index
    %c0_29 = arith.constant 0 : index
    %55 = vector.load %arg8[%c0_27, %c0_28, %c0_29] : memref<2x32x16xbf16, #tpu.memory_space<vmem>>, vector<1x32x16xbf16>
    %56 = vector.shape_cast %55 : vector<1x32x16xbf16> to vector<32x16xbf16>
    %cst_30 = arith.constant dense<0.000000e+00> : vector<32x16xf32>
    %57 = tpu.matmul %53, %56, %cst_30 {dimension_numbers = #tpu.dot_dimension_numbers<[1], [0], [0], [1], [0, 0, 1, 1], [], []>} : vector<32x32xbf16>, vector<32x16xbf16>, vector<32x16xf32> -> vector<32x16xf32>
    %c0_31 = arith.constant 0 : index
    %c0_32 = arith.constant 0 : index
    %c0_33 = arith.constant 0 : index
    %58 = vector.load %arg9[%c0_31, %c0_32, %c0_33] : memref<2x1x16xf32, #tpu.memory_space<vmem>>, vector<1x1x16xf32>
    %59 = vector.shape_cast %58 : vector<1x1x16xf32> to vector<1x16xf32>
    %60 = vector.broadcast %59 : vector<1x16xf32> to vector<32x16xf32>
    %61 = arith.addf %57, %60 : vector<32x16xf32>
    %c0_34 = arith.constant 0 : index
    %c0_35 = arith.constant 0 : index
    %c0_36 = arith.constant 0 : index
    %62 = vector.load %arg10[%c0_34, %c0_35, %c0_36] : memref<2x32x16xbf16, #tpu.memory_space<vmem>>, vector<1x32x16xbf16>
    %63 = vector.shape_cast %62 : vector<1x32x16xbf16> to vector<32x16xbf16>
    %cst_37 = arith.constant dense<0.000000e+00> : vector<32x16xf32>
    %64 = tpu.matmul %53, %63, %cst_37 {dimension_numbers = #tpu.dot_dimension_numbers<[1], [0], [0], [1], [0, 0, 1, 1], [], []>} : vector<32x32xbf16>, vector<32x16xbf16>, vector<32x16xf32> -> vector<32x16xf32>
    %c0_38 = arith.constant 0 : index
    %c0_39 = arith.constant 0 : index
    %c0_40 = arith.constant 0 : index
    %65 = vector.load %arg11[%c0_38, %c0_39, %c0_40] : memref<2x1x16xf32, #tpu.memory_space<vmem>>, vector<1x1x16xf32>
    %66 = vector.shape_cast %65 : vector<1x1x16xf32> to vector<1x16xf32>
    %67 = vector.broadcast %66 : vector<1x16xf32> to vector<32x16xf32>
    %68 = arith.addf %64, %67 : vector<32x16xf32>
    %c0_41 = arith.constant 0 : index
    %c0_42 = arith.constant 0 : index
    %c0_43 = arith.constant 0 : index
    %69 = vector.load %arg12[%c0_41, %c0_42, %c0_43] : memref<2x32x16xbf16, #tpu.memory_space<vmem>>, vector<1x32x16xbf16>
    %70 = vector.shape_cast %69 : vector<1x32x16xbf16> to vector<32x16xbf16>
    %cst_44 = arith.constant dense<0.000000e+00> : vector<32x16xf32>
    %71 = tpu.matmul %53, %70, %cst_44 {dimension_numbers = #tpu.dot_dimension_numbers<[1], [0], [0], [1], [0, 0, 1, 1], [], []>} : vector<32x32xbf16>, vector<32x16xbf16>, vector<32x16xf32> -> vector<32x16xf32>
    %c0_45 = arith.constant 0 : index
    %c0_46 = arith.constant 0 : index
    %c0_47 = arith.constant 0 : index
    %72 = vector.load %arg13[%c0_45, %c0_46, %c0_47] : memref<2x1x16xf32, #tpu.memory_space<vmem>>, vector<1x1x16xf32>
    %73 = vector.shape_cast %72 : vector<1x1x16xf32> to vector<1x16xf32>
    %74 = vector.broadcast %73 : vector<1x16xf32> to vector<32x16xf32>
    %75 = arith.addf %71, %74 : vector<32x16xf32>
    %76 = vector.shape_cast %61 : vector<32x16xf32> to vector<2x16x16xf32>
    %77 = arith.truncf %76 : vector<2x16x16xf32> to vector<2x16x16xbf16>
    %78 = vector.shape_cast %68 : vector<32x16xf32> to vector<2x16x16xf32>
    %79 = arith.truncf %78 : vector<2x16x16xf32> to vector<2x16x16xbf16>
    %80 = vector.shape_cast %75 : vector<32x16xf32> to vector<2x16x16xf32>
    %81 = arith.truncf %80 : vector<2x16x16xf32> to vector<2x16x16xbf16>
    "tpu.trace_start"() <{level = 10 : i32, message = "bqd,bkd->bqk"}> : () -> ()
    %cst_48 = arith.constant dense<0.000000e+00> : vector<2x16x16xf32>
    %82 = tpu.matmul %77, %79, %cst_48 {dimension_numbers = #tpu.dot_dimension_numbers<[2], [2], [1], [1], [0, 0, 0, 1, 1, 1], [0], [0]>} : vector<2x16x16xbf16>, vector<2x16x16xbf16>, vector<2x16x16xf32> -> vector<2x16x16xf32>
    "tpu.trace_stop"() : () -> ()
    %cst_49 = arith.constant 2.500000e-01 : f32
    %83 = vector.broadcast %cst_49 : f32 to vector<2x16x16xf32>
    %84 = arith.mulf %82, %83 : vector<2x16x16xf32>
    %cst_50 = arith.constant dense<0xFF800000> : vector<2x16xf32>
    %85 = vector.multi_reduction <maximumf>, %84, %cst_50 [2] : vector<2x16x16xf32> to vector<2x16xf32>
    %86 = vector.shape_cast %85 : vector<2x16xf32> to vector<2x16x1xf32>
    %87 = vector.broadcast %86 : vector<2x16x1xf32> to vector<2x16x16xf32>
    %88 = arith.subf %84, %87 : vector<2x16x16xf32>
    %89 = math.exp %88 : vector<2x16x16xf32>
    %cst_51 = arith.constant dense<0.000000e+00> : vector<2x16xf32>
    %90 = vector.multi_reduction <add>, %89, %cst_51 [2] : vector<2x16x16xf32> to vector<2x16xf32>
    %91 = vector.shape_cast %90 : vector<2x16xf32> to vector<2x16x1xf32>
    %92 = tpu.reciprocal %91 {approx = true} : vector<2x16x1xf32> -> vector<2x16x1xf32>
    %93 = vector.broadcast %92 : vector<2x16x1xf32> to vector<2x16x16xf32>
    %94 = arith.mulf %89, %93 : vector<2x16x16xf32>
    %95 = arith.truncf %94 : vector<2x16x16xf32> to vector<2x16x16xbf16>
    "tpu.trace_start"() <{level = 10 : i32, message = "bqk,bkd->bqd"}> : () -> ()
    %cst_52 = arith.constant dense<0.000000e+00> : vector<2x16x16xf32>
    %96 = tpu.matmul %95, %81, %cst_52 {dimension_numbers = #tpu.dot_dimension_numbers<[2], [1], [1], [2], [0, 0, 0, 1, 1, 2], [0], [0]>} : vector<2x16x16xbf16>, vector<2x16x16xbf16>, vector<2x16x16xf32> -> vector<2x16x16xf32>
    "tpu.trace_stop"() : () -> ()
    %97 = vector.shape_cast %96 : vector<2x16x16xf32> to vector<32x16xf32>
    %98 = arith.truncf %97 : vector<32x16xf32> to vector<32x16xbf16>
    %c0_53 = arith.constant 0 : index
    %c0_54 = arith.constant 0 : index
    %c0_55 = arith.constant 0 : index
    %99 = vector.load %arg14[%c0_53, %c0_54, %c0_55] : memref<2x16x32xbf16, #tpu.memory_space<vmem>>, vector<1x16x32xbf16>
    %100 = vector.shape_cast %99 : vector<1x16x32xbf16> to vector<16x32xbf16>
    %cst_56 = arith.constant dense<0.000000e+00> : vector<32x32xf32>
    %101 = tpu.matmul %98, %100, %cst_56 {dimension_numbers = #tpu.dot_dimension_numbers<[1], [0], [0], [1], [0, 0, 1, 1], [], []>} : vector<32x16xbf16>, vector<16x32xbf16>, vector<32x32xf32> -> vector<32x32xf32>
    %102 = arith.addf %54, %101 : vector<32x32xf32>
    %c1 = arith.constant 1 : index
    %c0_57 = arith.constant 0 : index
    %c0_58 = arith.constant 0 : index
    %103 = vector.load %arg8[%c1, %c0_57, %c0_58] : memref<2x32x16xbf16, #tpu.memory_space<vmem>>, vector<1x32x16xbf16>
    %104 = vector.shape_cast %103 : vector<1x32x16xbf16> to vector<32x16xbf16>
    %cst_59 = arith.constant dense<0.000000e+00> : vector<32x16xf32>
    %105 = tpu.matmul %53, %104, %cst_59 {dimension_numbers = #tpu.dot_dimension_numbers<[1], [0], [0], [1], [0, 0, 1, 1], [], []>} : vector<32x32xbf16>, vector<32x16xbf16>, vector<32x16xf32> -> vector<32x16xf32>
    %c1_60 = arith.constant 1 : index
    %c0_61 = arith.constant 0 : index
    %c0_62 = arith.constant 0 : index
    %106 = vector.load %arg9[%c1_60, %c0_61, %c0_62] : memref<2x1x16xf32, #tpu.memory_space<vmem>>, vector<1x1x16xf32>
    %107 = vector.shape_cast %106 : vector<1x1x16xf32> to vector<1x16xf32>
    %108 = vector.broadcast %107 : vector<1x16xf32> to vector<32x16xf32>
    %109 = arith.addf %105, %108 : vector<32x16xf32>
    %c1_63 = arith.constant 1 : index
    %c0_64 = arith.constant 0 : index
    %c0_65 = arith.constant 0 : index
    %110 = vector.load %arg10[%c1_63, %c0_64, %c0_65] : memref<2x32x16xbf16, #tpu.memory_space<vmem>>, vector<1x32x16xbf16>
    %111 = vector.shape_cast %110 : vector<1x32x16xbf16> to vector<32x16xbf16>
    %cst_66 = arith.constant dense<0.000000e+00> : vector<32x16xf32>
    %112 = tpu.matmul %53, %111, %cst_66 {dimension_numbers = #tpu.dot_dimension_numbers<[1], [0], [0], [1], [0, 0, 1, 1], [], []>} : vector<32x32xbf16>, vector<32x16xbf16>, vector<32x16xf32> -> vector<32x16xf32>
    %c1_67 = arith.constant 1 : index
    %c0_68 = arith.constant 0 : index
    %c0_69 = arith.constant 0 : index
    %113 = vector.load %arg11[%c1_67, %c0_68, %c0_69] : memref<2x1x16xf32, #tpu.memory_space<vmem>>, vector<1x1x16xf32>
    %114 = vector.shape_cast %113 : vector<1x1x16xf32> to vector<1x16xf32>
    %115 = vector.broadcast %114 : vector<1x16xf32> to vector<32x16xf32>
    %116 = arith.addf %112, %115 : vector<32x16xf32>
    %c1_70 = arith.constant 1 : index
    %c0_71 = arith.constant 0 : index
    %c0_72 = arith.constant 0 : index
    %117 = vector.load %arg12[%c1_70, %c0_71, %c0_72] : memref<2x32x16xbf16, #tpu.memory_space<vmem>>, vector<1x32x16xbf16>
    %118 = vector.shape_cast %117 : vector<1x32x16xbf16> to vector<32x16xbf16>
    %cst_73 = arith.constant dense<0.000000e+00> : vector<32x16xf32>
    %119 = tpu.matmul %53, %118, %cst_73 {dimension_numbers = #tpu.dot_dimension_numbers<[1], [0], [0], [1], [0, 0, 1, 1], [], []>} : vector<32x32xbf16>, vector<32x16xbf16>, vector<32x16xf32> -> vector<32x16xf32>
    %c1_74 = arith.constant 1 : index
    %c0_75 = arith.constant 0 : index
    %c0_76 = arith.constant 0 : index
    %120 = vector.load %arg13[%c1_74, %c0_75, %c0_76] : memref<2x1x16xf32, #tpu.memory_space<vmem>>, vector<1x1x16xf32>
    %121 = vector.shape_cast %120 : vector<1x1x16xf32> to vector<1x16xf32>
    %122 = vector.broadcast %121 : vector<1x16xf32> to vector<32x16xf32>
    %123 = arith.addf %119, %122 : vector<32x16xf32>
    %124 = vector.shape_cast %109 : vector<32x16xf32> to vector<2x16x16xf32>
    %125 = arith.truncf %124 : vector<2x16x16xf32> to vector<2x16x16xbf16>
    %126 = vector.shape_cast %116 : vector<32x16xf32> to vector<2x16x16xf32>
    %127 = arith.truncf %126 : vector<2x16x16xf32> to vector<2x16x16xbf16>
    %128 = vector.shape_cast %123 : vector<32x16xf32> to vector<2x16x16xf32>
    %129 = arith.truncf %128 : vector<2x16x16xf32> to vector<2x16x16xbf16>
    "tpu.trace_start"() <{level = 10 : i32, message = "bqd,bkd->bqk"}> : () -> ()
    %cst_77 = arith.constant dense<0.000000e+00> : vector<2x16x16xf32>
    %130 = tpu.matmul %125, %127, %cst_77 {dimension_numbers = #tpu.dot_dimension_numbers<[2], [2], [1], [1], [0, 0, 0, 1, 1, 1], [0], [0]>} : vector<2x16x16xbf16>, vector<2x16x16xbf16>, vector<2x16x16xf32> -> vector<2x16x16xf32>
    "tpu.trace_stop"() : () -> ()
    %cst_78 = arith.constant 2.500000e-01 : f32
    %131 = vector.broadcast %cst_78 : f32 to vector<2x16x16xf32>
    %132 = arith.mulf %130, %131 : vector<2x16x16xf32>
    %cst_79 = arith.constant dense<0xFF800000> : vector<2x16xf32>
    %133 = vector.multi_reduction <maximumf>, %132, %cst_79 [2] : vector<2x16x16xf32> to vector<2x16xf32>
    %134 = vector.shape_cast %133 : vector<2x16xf32> to vector<2x16x1xf32>
    %135 = vector.broadcast %134 : vector<2x16x1xf32> to vector<2x16x16xf32>
    %136 = arith.subf %132, %135 : vector<2x16x16xf32>
    %137 = math.exp %136 : vector<2x16x16xf32>
    %cst_80 = arith.constant dense<0.000000e+00> : vector<2x16xf32>
    %138 = vector.multi_reduction <add>, %137, %cst_80 [2] : vector<2x16x16xf32> to vector<2x16xf32>
    %139 = vector.shape_cast %138 : vector<2x16xf32> to vector<2x16x1xf32>
    %140 = tpu.reciprocal %139 {approx = true} : vector<2x16x1xf32> -> vector<2x16x1xf32>
    %141 = vector.broadcast %140 : vector<2x16x1xf32> to vector<2x16x16xf32>
    %142 = arith.mulf %137, %141 : vector<2x16x16xf32>
    %143 = arith.truncf %142 : vector<2x16x16xf32> to vector<2x16x16xbf16>
    "tpu.trace_start"() <{level = 10 : i32, message = "bqk,bkd->bqd"}> : () -> ()
    %cst_81 = arith.constant dense<0.000000e+00> : vector<2x16x16xf32>
    %144 = tpu.matmul %143, %129, %cst_81 {dimension_numbers = #tpu.dot_dimension_numbers<[2], [1], [1], [2], [0, 0, 0, 1, 1, 2], [0], [0]>} : vector<2x16x16xbf16>, vector<2x16x16xbf16>, vector<2x16x16xf32> -> vector<2x16x16xf32>
    "tpu.trace_stop"() : () -> ()
    %145 = vector.shape_cast %144 : vector<2x16x16xf32> to vector<32x16xf32>
    %146 = arith.truncf %145 : vector<32x16xf32> to vector<32x16xbf16>
    %c1_82 = arith.constant 1 : index
    %c0_83 = arith.constant 0 : index
    %c0_84 = arith.constant 0 : index
    %147 = vector.load %arg14[%c1_82, %c0_83, %c0_84] : memref<2x16x32xbf16, #tpu.memory_space<vmem>>, vector<1x16x32xbf16>
    %148 = vector.shape_cast %147 : vector<1x16x32xbf16> to vector<16x32xbf16>
    %cst_85 = arith.constant dense<0.000000e+00> : vector<32x32xf32>
    %149 = tpu.matmul %146, %148, %cst_85 {dimension_numbers = #tpu.dot_dimension_numbers<[1], [0], [0], [1], [0, 0, 1, 1], [], []>} : vector<32x16xbf16>, vector<16x32xbf16>, vector<32x32xf32> -> vector<32x32xf32>
    %150 = arith.addf %102, %149 : vector<32x32xf32>
    %151 = arith.addf %30, %150 : vector<32x32xf32>
    %c0_86 = arith.constant 0 : index
    %c0_87 = arith.constant 0 : index
    %152 = vector.load %arg15[%c0_86, %c0_87] : memref<1x32xf32, #tpu.memory_space<vmem>>, vector<1x32xf32>
    %153 = vector.broadcast %152 : vector<1x32xf32> to vector<32x32xf32>
    %154 = arith.addf %151, %153 : vector<32x32xf32>
    %c0_88 = arith.constant 0 : index
    %c0_89 = arith.constant 0 : index
    %155 = vector.load %arg16[%c0_88, %c0_89] : memref<1x32xf32, #tpu.memory_space<vmem>>, vector<1x32xf32>
    %c0_90 = arith.constant 0 : index
    %c0_91 = arith.constant 0 : index
    %156 = vector.load %arg17[%c0_90, %c0_91] : memref<1x32xf32, #tpu.memory_space<vmem>>, vector<1x32xf32>
    %cst_92 = arith.constant dense<0.000000e+00> : vector<32xf32>
    %157 = vector.multi_reduction <add>, %154, %cst_92 [1] : vector<32x32xf32> to vector<32xf32>
    %158 = vector.shape_cast %157 : vector<32xf32> to vector<32x1xf32>
    %cst_93 = arith.constant 3.200000e+01 : f32
    %159 = vector.broadcast %cst_93 : f32 to vector<32x1xf32>
    %160 = arith.divf %158, %159 : vector<32x1xf32>
    %161 = vector.broadcast %160 : vector<32x1xf32> to vector<32x32xf32>
    %162 = arith.subf %154, %161 : vector<32x32xf32>
    %163 = arith.mulf %162, %162 : vector<32x32xf32>
    %cst_94 = arith.constant dense<0.000000e+00> : vector<32xf32>
    %164 = vector.multi_reduction <add>, %163, %cst_94 [1] : vector<32x32xf32> to vector<32xf32>
    %165 = vector.shape_cast %164 : vector<32xf32> to vector<32x1xf32>
    %cst_95 = arith.constant 3.200000e+01 : f32
    %166 = vector.broadcast %cst_95 : f32 to vector<32x1xf32>
    %167 = arith.divf %165, %166 : vector<32x1xf32>
    %cst_96 = arith.constant 9.99999974E-6 : f32
    %168 = vector.broadcast %cst_96 : f32 to vector<32x1xf32>
    %169 = arith.addf %167, %168 : vector<32x1xf32>
    %170 = math.rsqrt %169 : vector<32x1xf32>
    %171 = vector.broadcast %170 : vector<32x1xf32> to vector<32x32xf32>
    %172 = arith.mulf %162, %171 : vector<32x32xf32>
    %173 = vector.broadcast %155 : vector<1x32xf32> to vector<32x32xf32>
    %174 = arith.mulf %172, %173 : vector<32x32xf32>
    %175 = vector.broadcast %156 : vector<1x32xf32> to vector<32x32xf32>
    %176 = arith.addf %174, %175 : vector<32x32xf32>
    %177 = arith.truncf %176 : vector<32x32xf32> to vector<32x32xbf16>
    %c0_97 = arith.constant 0 : index
    %c0_98 = arith.constant 0 : index
    %178 = vector.load %arg18[%c0_97, %c0_98] : memref<32x128xbf16, #tpu.memory_space<vmem>>, vector<32x128xbf16>
    %cst_99 = arith.constant dense<0.000000e+00> : vector<32x128xf32>
    %179 = tpu.matmul %177, %178, %cst_99 {dimension_numbers = #tpu.dot_dimension_numbers<[1], [0], [0], [1], [0, 0, 1, 1], [], []>} : vector<32x32xbf16>, vector<32x128xbf16>, vector<32x128xf32> -> vector<32x128xf32>
    %c0_100 = arith.constant 0 : index
    %c0_101 = arith.constant 0 : index
    %180 = vector.load %arg19[%c0_100, %c0_101] : memref<1x128xf32, #tpu.memory_space<vmem>>, vector<1x128xf32>
    %181 = vector.broadcast %180 : vector<1x128xf32> to vector<32x128xf32>
    %182 = arith.addf %179, %181 : vector<32x128xf32>
    %183 = arith.mulf %182, %182 : vector<32x128xf32>
    %184 = arith.mulf %182, %183 : vector<32x128xf32>
    %cst_102 = arith.constant 4.471500e-02 : f32
    %185 = vector.broadcast %cst_102 : f32 to vector<32x128xf32>
    %186 = arith.mulf %185, %184 : vector<32x128xf32>
    %187 = arith.addf %182, %186 : vector<32x128xf32>
    %cst_103 = arith.constant 0.797884583 : f32
    %188 = vector.broadcast %cst_103 : f32 to vector<32x128xf32>
    %189 = arith.mulf %188, %187 : vector<32x128xf32>
    %190 = math.tanh %189 : vector<32x128xf32>
    %cst_104 = arith.constant 1.000000e+00 : f32
    %191 = vector.broadcast %cst_104 : f32 to vector<32x128xf32>
    %192 = arith.addf %191, %190 : vector<32x128xf32>
    %cst_105 = arith.constant 5.000000e-01 : f32
    %193 = vector.broadcast %cst_105 : f32 to vector<32x128xf32>
    %194 = arith.mulf %193, %192 : vector<32x128xf32>
    %195 = arith.mulf %182, %194 : vector<32x128xf32>
    %196 = arith.truncf %195 : vector<32x128xf32> to vector<32x128xbf16>
    %c0_106 = arith.constant 0 : index
    %c0_107 = arith.constant 0 : index
    %197 = vector.load %arg20[%c0_106, %c0_107] : memref<128x32xbf16, #tpu.memory_space<vmem>>, vector<128x32xbf16>
    %cst_108 = arith.constant dense<0.000000e+00> : vector<32x32xf32>
    %198 = tpu.matmul %196, %197, %cst_108 {dimension_numbers = #tpu.dot_dimension_numbers<[1], [0], [0], [1], [0, 0, 1, 1], [], []>} : vector<32x128xbf16>, vector<128x32xbf16>, vector<32x32xf32> -> vector<32x32xf32>
    %199 = arith.addf %154, %198 : vector<32x32xf32>
    %c0_109 = arith.constant 0 : index
    %c0_110 = arith.constant 0 : index
    %200 = vector.load %arg21[%c0_109, %c0_110] : memref<1x32xf32, #tpu.memory_space<vmem>>, vector<1x32xf32>
    %201 = vector.broadcast %200 : vector<1x32xf32> to vector<32x32xf32>
    %202 = arith.addf %199, %201 : vector<32x32xf32>
    %c0_111 = arith.constant 0 : index
    %c0_112 = arith.constant 0 : index
    %203 = vector.load %arg22[%c0_111, %c0_112] : memref<1x32xf32, #tpu.memory_space<vmem>>, vector<1x32xf32>
    %c0_113 = arith.constant 0 : index
    %c0_114 = arith.constant 0 : index
    %204 = vector.load %arg23[%c0_113, %c0_114] : memref<1x32xf32, #tpu.memory_space<vmem>>, vector<1x32xf32>
    %cst_115 = arith.constant dense<0.000000e+00> : vector<32xf32>
    %205 = vector.multi_reduction <add>, %202, %cst_115 [1] : vector<32x32xf32> to vector<32xf32>
    %206 = vector.shape_cast %205 : vector<32xf32> to vector<32x1xf32>
    %cst_116 = arith.constant 3.200000e+01 : f32
    %207 = vector.broadcast %cst_116 : f32 to vector<32x1xf32>
    %208 = arith.divf %206, %207 : vector<32x1xf32>
    %209 = vector.broadcast %208 : vector<32x1xf32> to vector<32x32xf32>
    %210 = arith.subf %202, %209 : vector<32x32xf32>
    %211 = arith.mulf %210, %210 : vector<32x32xf32>
    %cst_117 = arith.constant dense<0.000000e+00> : vector<32xf32>
    %212 = vector.multi_reduction <add>, %211, %cst_117 [1] : vector<32x32xf32> to vector<32xf32>
    %213 = vector.shape_cast %212 : vector<32xf32> to vector<32x1xf32>
    %cst_118 = arith.constant 3.200000e+01 : f32
    %214 = vector.broadcast %cst_118 : f32 to vector<32x1xf32>
    %215 = arith.divf %213, %214 : vector<32x1xf32>
    %cst_119 = arith.constant 9.99999974E-6 : f32
    %216 = vector.broadcast %cst_119 : f32 to vector<32x1xf32>
    %217 = arith.addf %215, %216 : vector<32x1xf32>
    %218 = math.rsqrt %217 : vector<32x1xf32>
    %219 = vector.broadcast %218 : vector<32x1xf32> to vector<32x32xf32>
    %220 = arith.mulf %210, %219 : vector<32x32xf32>
    %221 = vector.broadcast %203 : vector<1x32xf32> to vector<32x32xf32>
    %222 = arith.mulf %220, %221 : vector<32x32xf32>
    %223 = vector.broadcast %204 : vector<1x32xf32> to vector<32x32xf32>
    %224 = arith.addf %222, %223 : vector<32x32xf32>
    %225 = arith.truncf %224 : vector<32x32xf32> to vector<32x32xbf16>
    %c0_120 = arith.constant 0 : index
    %c0_121 = arith.constant 0 : index
    %226 = vector.load %arg24[%c0_120, %c0_121] : memref<32x128xbf16, #tpu.memory_space<vmem>>, vector<32x128xbf16>
    %cst_122 = arith.constant dense<0.000000e+00> : vector<32x128xf32>
    %227 = tpu.matmul %225, %226, %cst_122 {dimension_numbers = #tpu.dot_dimension_numbers<[1], [0], [0], [1], [0, 0, 1, 1], [], []>} : vector<32x32xbf16>, vector<32x128xbf16>, vector<32x128xf32> -> vector<32x128xf32>
    %c0_123 = arith.constant 0 : index
    %c0_124 = arith.constant 0 : index
    %228 = vector.load %arg25[%c0_123, %c0_124] : memref<1x128xf32, #tpu.memory_space<vmem>>, vector<1x128xf32>
    %229 = vector.broadcast %228 : vector<1x128xf32> to vector<32x128xf32>
    %230 = arith.addf %227, %229 : vector<32x128xf32>
    %c0_125 = arith.constant 0 : index
    %c0_126 = arith.constant 0 : index
    %231 = vector.load %arg26[%c0_125, %c0_126] : memref<32x128xf32, #tpu.memory_space<vmem>>, vector<32x128xf32>
    tpu.vector_store %arg26[%c0_125, %c0_126], %230 {strides = array<i32>} : memref<32x128xf32, #tpu.memory_space<vmem>>, vector<32x128xf32>,
    return
  }
}

</mosaic_0001>

<llo_original>
// kernel: maskgit_forward.3
$region0: #{maskgit_forward.3}
  #allocation0 [shape = 'u32[]', space=smem, size = 0x4, offset = 0x4, fixed_abs, tag = 'smem constant byte address 0x4 - core index']
  #allocation1 [shape = 'u32[144,128]{1,0:T(1,128)}', space=vmem, size = 0x12000, scoped, tag = 'internal scratch']
  %s0 = inlined_call_operand.vmem [shape: f32[32,48], index: 0, kind: input, shape index: {}]
  %s1 = inlined_call_operand.vmem [shape: s32[32,1], index: 1, kind: input, shape index: {}]
  %s2 = inlined_call_operand.vmem [shape: f32[48,32], index: 2, kind: input, shape index: {}]
  %s3 = inlined_call_operand.vmem [shape: f32[1,32], index: 3, kind: input, shape index: {}]
  %s4 = inlined_call_operand.vmem [shape: bf16[128,32], index: 4, kind: input, shape index: {}]
  %s5 = inlined_call_operand.vmem [shape: f32[32,32], index: 5, kind: input, shape index: {}]
  %s6 = inlined_call_operand.vmem [shape: f32[1,32], index: 6, kind: input, shape index: {}]
  %s7 = inlined_call_operand.vmem [shape: f32[1,32], index: 7, kind: input, shape index: {}]
  %s8 = inlined_call_operand.vmem [shape: bf16[2,32,16], index: 8, kind: input, shape index: {}]
  %s9 = inlined_call_operand.vmem [shape: f32[2,1,16], index: 9, kind: input, shape index: {}]
  %s10 = inlined_call_operand.vmem [shape: bf16[2,32,16], index: 10, kind: input, shape index: {}]
  %s11 = inlined_call_operand.vmem [shape: f32[2,1,16], index: 11, kind: input, shape index: {}]
  %s12 = inlined_call_operand.vmem [shape: bf16[2,32,16], index: 12, kind: input, shape index: {}]
  %s13 = inlined_call_operand.vmem [shape: f32[2,1,16], index: 13, kind: input, shape index: {}]
  %s14 = inlined_call_operand.vmem [shape: bf16[2,16,32], index: 14, kind: input, shape index: {}]
  %s15 = inlined_call_operand.vmem [shape: f32[1,32], index: 15, kind: input, shape index: {}]
  %s16 = inlined_call_operand.vmem [shape: f32[1,32], index: 16, kind: input, shape index: {}]
  %s17 = inlined_call_operand.vmem [shape: f32[1,32], index: 17, kind: input, shape index: {}]
  %s18 = inlined_call_operand.vmem [shape: bf16[32,128], index: 18, kind: input, shape index: {}]
  %s19 = inlined_call_operand.vmem [shape: f32[1,128], index: 19, kind: input, shape index: {}]
  %s20 = inlined_call_operand.vmem [shape: bf16[128,32], index: 20, kind: input, shape index: {}]
  %s21 = inlined_call_operand.vmem [shape: f32[1,32], index: 21, kind: input, shape index: {}]
  %s22 = inlined_call_operand.vmem [shape: f32[1,32], index: 22, kind: input, shape index: {}]
  %s23 = inlined_call_operand.vmem [shape: f32[1,32], index: 23, kind: input, shape index: {}]
  %s24 = inlined_call_operand.vmem [shape: bf16[32,128], index: 24, kind: input, shape index: {}]
  %s25 = inlined_call_operand.vmem [shape: f32[1,128], index: 25, kind: input, shape index: {}]
  %s26 = inlined_call_operand.hbm [shape: f32[32,128], index: 26, kind: output, shape index: {0}]
  %s27 = inlined_call_operand.vmem [shape: s32[32,1], index: 27, kind: output, shape index: {1}]
  %28 = xla_tuple %s26, %s27
  %s29 = sld [smem:[#allocation0]]
  $region122: #{maskgit_forward.3} parent=0
    _
  %s31 = ssub.s32 1, %s29
  %s32 = scalar_select 0, %s31, %s29
  $region1: #{maskgit_forward.3} parent=0
    #allocation2 [shape = 'u8[16384]{0}', space=vmem, size = 0x4000, scoped, tag = 'output window, operand 0, single buffered']
    #allocation3 [shape = 's32[1]{0}', space=sflag, size = 0x4, scoped, tag = 'scoped memory for maskgit_forward.3']
    %33 = vsyncpa [#allocation3], 0
    // Predicated region
    $region2: #{maskgit_forward.3} parent=1 // pred_check
      _
    $region3: #{maskgit_forward.3} parent=1 // pred_check_branch
      %35 = sbr.rel (0) target = $region5
    $region4: #{maskgit_forward.3} parent=1 // pred_region
      _
    $region5: #{maskgit_forward.3} parent=1 // pred_fallthru
      _
    // Predicated region
    $region6: #{maskgit_forward.3} parent=1 // pred_check
      _
    $region7: #{maskgit_forward.3} parent=1 // pred_check_branch
      %37 = sbr.rel (0) target = $region9
    $region8: #{maskgit_forward.3} parent=1 // pred_region
      _
    $region9: #{maskgit_forward.3} parent=1 // pred_fallthru
      _
    // Predicated region
    $region10: #{maskgit_forward.3} parent=1 // pred_check
      _
    $region11: #{maskgit_forward.3} parent=1 // pred_check_branch
      %39 = sbr.rel (0) target = $region13
    $region12: #{maskgit_forward.3} parent=1 // pred_region
      _
    $region13: #{maskgit_forward.3} parent=1 // pred_fallthru
      _
    // Predicated region
    $region14: #{maskgit_forward.3} parent=1 // pred_check
      _
    $region15: #{maskgit_forward.3} parent=1 // pred_check_branch
      %41 = sbr.rel (0) target = $region17
    $region16: #{maskgit_forward.3} parent=1 // pred_region
      _
    $region17: #{maskgit_forward.3} parent=1 // pred_fallthru
      _
    // Predicated region
    $region18: #{maskgit_forward.3} parent=1 // pred_check
      _
    $region19: #{maskgit_forward.3} parent=1 // pred_check_branch
      %43 = sbr.rel (0) target = $region21
    $region20: #{maskgit_forward.3} parent=1 // pred_region
      _
    $region21: #{maskgit_forward.3} parent=1 // pred_fallthru
      _
    // Predicated region
    $region22: #{maskgit_forward.3} parent=1 // pred_check
      _
    $region23: #{maskgit_forward.3} parent=1 // pred_check_branch
      %45 = sbr.rel (0) target = $region25
    $region24: #{maskgit_forward.3} parent=1 // pred_region
      _
    $region25: #{maskgit_forward.3} parent=1 // pred_fallthru
      _
    // Predicated region
    $region26: #{maskgit_forward.3} parent=1 // pred_check
      _
    $region27: #{maskgit_forward.3} parent=1 // pred_check_branch
      %47 = sbr.rel (0) target = $region29
    $region28: #{maskgit_forward.3} parent=1 // pred_region
      _
    $region29: #{maskgit_forward.3} parent=1 // pred_fallthru
      _
    // Predicated region
    $region30: #{maskgit_forward.3} parent=1 // pred_check
      _
    $region31: #{maskgit_forward.3} parent=1 // pred_check_branch
      %49 = sbr.rel (0) target = $region33
    $region32: #{maskgit_forward.3} parent=1 // pred_region
      _
    $region33: #{maskgit_forward.3} parent=1 // pred_fallthru
      _
    // Predicated region
    $region34: #{maskgit_forward.3} parent=1 // pred_check
      _
    $region35: #{maskgit_forward.3} parent=1 // pred_check_branch
      %51 = sbr.rel (0) target = $region37
    $region36: #{maskgit_forward.3} parent=1 // pred_region
      _
    $region37: #{maskgit_forward.3} parent=1 // pred_fallthru
      _
    // Predicated region
    $region38: #{maskgit_forward.3} parent=1 // pred_check
      _
    $region39: #{maskgit_forward.3} parent=1 // pred_check_branch
      %53 = sbr.rel (0) target = $region41
    $region40: #{maskgit_forward.3} parent=1 // pred_region
      _
    $region41: #{maskgit_forward.3} parent=1 // pred_fallthru
      _
    // Predicated region
    $region42: #{maskgit_forward.3} parent=1 // pred_check
      _
    $region43: #{maskgit_forward.3} parent=1 // pred_check_branch
      %55 = sbr.rel (0) target = $region45
    $region44: #{maskgit_forward.3} parent=1 // pred_region
      _
    $region45: #{maskgit_forward.3} parent=1 // pred_fallthru
      _
    // Predicated region
    $region46: #{maskgit_forward.3} parent=1 // pred_check
      _
    $region47: #{maskgit_forward.3} parent=1 // pred_check_branch
      %57 = sbr.rel (0) target = $region49
    $region48: #{maskgit_forward.3} parent=1 // pred_region
      _
    $region49: #{maskgit_forward.3} parent=1 // pred_fallthru
      _
    // Predicated region
    $region50: #{maskgit_forward.3} parent=1 // pred_check
      _
    $region51: #{maskgit_forward.3} parent=1 // pred_check_branch
      %59 = sbr.rel (0) target = $region53
    $region52: #{maskgit_forward.3} parent=1 // pred_region
      _
    $region53: #{maskgit_forward.3} parent=1 // pred_fallthru
      _
    // Predicated region
    $region54: #{maskgit_forward.3} parent=1 // pred_check
      _
    $region55: #{maskgit_forward.3} parent=1 // pred_check_branch
      %61 = sbr.rel (0) target = $region57
    $region56: #{maskgit_forward.3} parent=1 // pred_region
      _
    $region57: #{maskgit_forward.3} parent=1 // pred_fallthru
      _
    // Predicated region
    $region58: #{maskgit_forward.3} parent=1 // pred_check
      _
    $region59: #{maskgit_forward.3} parent=1 // pred_check_branch
      %63 = sbr.rel (0) target = $region61
    $region60: #{maskgit_forward.3} parent=1 // pred_region
      _
    $region61: #{maskgit_forward.3} parent=1 // pred_fallthru
      _
    // Predicated region
    $region62: #{maskgit_forward.3} parent=1 // pred_check
      _
    $region63: #{maskgit_forward.3} parent=1 // pred_check_branch
      %65 = sbr.rel (0) target = $region65
    $region64: #{maskgit_forward.3} parent=1 // pred_region
      _
    $region65: #{maskgit_forward.3} parent=1 // pred_fallthru
      _
    // Predicated region
    $region66: #{maskgit_forward.3} parent=1 // pred_check
      _
    $region67: #{maskgit_forward.3} parent=1 // pred_check_branch
      %67 = sbr.rel (0) target = $region69
    $region68: #{maskgit_forward.3} parent=1 // pred_region
      _
    $region69: #{maskgit_forward.3} parent=1 // pred_fallthru
      _
    // Predicated region
    $region70: #{maskgit_forward.3} parent=1 // pred_check
      _
    $region71: #{maskgit_forward.3} parent=1 // pred_check_branch
      %69 = sbr.rel (0) target = $region73
    $region72: #{maskgit_forward.3} parent=1 // pred_region
      _
    $region73: #{maskgit_forward.3} parent=1 // pred_fallthru
      _
    // Predicated region
    $region74: #{maskgit_forward.3} parent=1 // pred_check
      _
    $region75: #{maskgit_forward.3} parent=1 // pred_check_branch
      %71 = sbr.rel (0) target = $region77
    $region76: #{maskgit_forward.3} parent=1 // pred_region
      _
    $region77: #{maskgit_forward.3} parent=1 // pred_fallthru
      _
    // Predicated region
    $region78: #{maskgit_forward.3} parent=1 // pred_check
      _
    $region79: #{maskgit_forward.3} parent=1 // pred_check_branch
      %73 = sbr.rel (0) target = $region81
    $region80: #{maskgit_forward.3} parent=1 // pred_region
      _
    $region81: #{maskgit_forward.3} parent=1 // pred_fallthru
      _
    // Predicated region
    $region82: #{maskgit_forward.3} parent=1 // pred_check
      _
    $region83: #{maskgit_forward.3} parent=1 // pred_check_branch
      %75 = sbr.rel (0) target = $region85
    $region84: #{maskgit_forward.3} parent=1 // pred_region
      _
    $region85: #{maskgit_forward.3} parent=1 // pred_fallthru
      _
    // Predicated region
    $region86: #{maskgit_forward.3} parent=1 // pred_check
      _
    $region87: #{maskgit_forward.3} parent=1 // pred_check_branch
      %77 = sbr.rel (0) target = $region89
    $region88: #{maskgit_forward.3} parent=1 // pred_region
      _
    $region89: #{maskgit_forward.3} parent=1 // pred_fallthru
      _
    // Predicated region
    $region90: #{maskgit_forward.3} parent=1 // pred_check
      _
    $region91: #{maskgit_forward.3} parent=1 // pred_check_branch
      %79 = sbr.rel (0) target = $region93
    $region92: #{maskgit_forward.3} parent=1 // pred_region
      _
    $region93: #{maskgit_forward.3} parent=1 // pred_fallthru
      _
    // Predicated region
    $region94: #{maskgit_forward.3} parent=1 // pred_check
      _
    $region95: #{maskgit_forward.3} parent=1 // pred_check_branch
      %81 = sbr.rel (0) target = $region97
    $region96: #{maskgit_forward.3} parent=1 // pred_region
      _
    $region97: #{maskgit_forward.3} parent=1 // pred_fallthru
      _
    // Predicated region
    $region98: #{maskgit_forward.3} parent=1 // pred_check
      _
    $region99: #{maskgit_forward.3} parent=1 // pred_check_branch
      %83 = sbr.rel (0) target = $region101
    $region100: #{maskgit_forward.3} parent=1 // pred_region
      _
    $region101: #{maskgit_forward.3} parent=1 // pred_fallthru
      _
    // Predicated region
    $region102: #{maskgit_forward.3} parent=1 // pred_check
      _
    $region103: #{maskgit_forward.3} parent=1 // pred_check_branch
      %85 = sbr.rel (0) target = $region105
    $region104: #{maskgit_forward.3} parent=1 // pred_region
      _
    $region105: #{maskgit_forward.3} parent=1 // pred_fallthru
      _
    %v87 = vld [vmem:[%s3] sm:$0x1]
    %v88 = vld [vmem:[%s0] sm:$0xff]
    %v89 = vld [vmem:[%s0 + $0x8] sm:$0xff]
    %v90 = vld [vmem:[%s0 + $0x10] sm:$0xff]
    %v91 = vld [vmem:[%s0 + $0x18] sm:$0xff]
    %v92 = vld [vmem:[%s2] sm:$0xff]
    %v93 = vld [vmem:[%s2 + $0x8] sm:$0xff]
    %v94 = vld [vmem:[%s2 + $0x10] sm:$0xff]
    %v95 = vld [vmem:[%s2 + $0x18] sm:$0xff]
    %v96 = vld [vmem:[%s2 + $0x20] sm:$0xff]
    %v97 = vld [vmem:[%s2 + $0x28] sm:$0xff]
    %vm98 = vcmask 392192
    %v100 = vsel %vm98, %v88, 0
    %v103 = vsel %vm98, %v89, 0
    %v106 = vsel %vm98, %v90, 0
    %v109 = vsel %vm98, %v91, 0
    %111 = vmatprep.subr.mxu0 0.0
    %112 = vmatpush1.msra.mxu0 0.0
    %113 = vmatprep.subr.mxu0 0.0
    %114 = vmatpush1.msra.mxu0 0.0
    %115 = vmatprep.subr.mxu0 0.0
    %116 = vmatpush1.msra.mxu0 0.0
    %117 = vmatprep.subr.mxu0 0.0
    %118 = vmatpush1.msra.mxu0 0.0
    %119 = vmatprep.subr.mxu0 0.0
    %120 = vmatpush1.msra.mxu0 0.0
    %121 = vmatprep.subr.mxu0 0.0
    %122 = vmatpush1.msra.mxu0 0.0
    %123 = vmatprep.subr.mxu0 0.0
    %124 = vmatpush1.msra.mxu0 0.0
    %125 = vmatprep.subr.mxu0 0.0
    %126 = vmatpush1.msra.mxu0 0.0
    %127 = vmatprep.subr.mxu0 0.0
    %128 = vmatpush1.msra.mxu0 0.0
    %129 = vmatprep.subr.mxu0 0.0
    %130 = vmatpush1.msra.mxu0 0.0
    %131 = vmatprep.subr.mxu0 0.0
    %132 = vmatpush1.msra.mxu0 %v97
    %133 = vmatprep.subr.mxu0 0.0
    %134 = vmatpush1.msra.mxu0 %v96
    %135 = vmatprep.subr.mxu0 0.0
    %136 = vmatpush1.msra.mxu0 %v95
    %137 = vmatprep.subr.mxu0 0.0
    %138 = vmatpush1.msra.mxu0 %v94
    %139 = vmatprep.subr.mxu0 0.0
    %140 = vmatpush1.msra.mxu0 %v93
    %141 = vmatprep.subr.mxu0 0.0
    %142 = vmatpush1.msra.mxu0 %v92
    %143 = vmatprep.subr.mxu0 0.0
    %144 = vmatpush2.msra.mxu0 0.0
    %145 = vmatprep.subr.mxu0 0.0
    %146 = vmatpush2.msra.mxu0 0.0
    %147 = vmatprep.subr.mxu0 0.0
    %148 = vmatpush2.msra.mxu0 0.0
    %149 = vmatprep.subr.mxu0 0.0
    %150 = vmatpush2.msra.mxu0 0.0
    %151 = vmatprep.subr.mxu0 0.0
    %152 = vmatpush2.msra.mxu0 0.0
    %153 = vmatprep.subr.mxu0 0.0
    %154 = vmatpush2.msra.mxu0 0.0
    %155 = vmatprep.subr.mxu0 0.0
    %156 = vmatpush2.msra.mxu0 0.0
    %157 = vmatprep.subr.mxu0 0.0
    %158 = vmatpush2.msra.mxu0 0.0
    %159 = vmatprep.subr.mxu0 0.0
    %160 = vmatpush2.msra.mxu0 0.0
    %161 = vmatprep.subr.mxu0 0.0
    %162 = vmatpush2.msra.mxu0 0.0
    %163 = vmatprep.subr.mxu0 0.0
    %164 = vmatpush2.msra.mxu0 0.0
    %165 = vmatprep.subr.mxu0 0.0
    %166 = vmatpush2.msra.mxu0 0.0
    %167 = vmatprep.subr.mxu0 0.0
    %168 = vmatpush2.msra.mxu0 0.0
    %169 = vmatprep.subr.mxu0 0.0
    %170 = vmatpush2.msra.mxu0 0.0
    %171 = vmatprep.subr.mxu0 0.0
    %172 = vmatpush2.msra.mxu0 0.0
    %173 = vmatprep.subr.mxu0 0.0
    %174 = vmatpush2.msra.mxu0 0.0
    %175 = vmatprep.mubr.f32.mxu0 0.0
    %176 = vmatmul.mubr.f32.gmra.mxu0 %v100
    %v177 = vpop.f32.mrf.mxu0
    %v178 = vadd.f32 0.0, %v177
    %v179 = vpop.f32.mrf.mxu0
    %180 = vmatprep.mubr.f32.mxu0 0.0
    %181 = vmatmul.mubr.f32.gmra.mxu0 %v103
    %v182 = vpop.f32.mrf.mxu0
    %v183 = vadd.f32 0.0, %v182
    %v184 = vpop.f32.mrf.mxu0
    %185 = vmatprep.mubr.f32.mxu0 0.0
    %186 = vmatmul.mubr.f32.gmra.mxu0 %v106
    %v187 = vpop.f32.mrf.mxu0
    %v188 = vadd.f32 0.0, %v187
    %v189 = vpop.f32.mrf.mxu0
    %190 = vmatprep.mubr.f32.mxu0 0.0
    %191 = vmatmul.mubr.f32.gmra.mxu0 %v109
    %v192 = vpop.f32.mrf.mxu0
    %v193 = vadd.f32 0.0, %v192
    %v194 = vpop.f32.mrf.mxu0
    %195 = vdwg.mxu0
    %v197 = vlaneseq
    %v198 = vshrl.u32 %v197, 7
    %v199 = vsub.s32 0, %v198
    %v200 = vrot.slane %v87, %v199
    %v202 = vadd.f32 %v200, %v178
    %v203 = vadd.f32 %v200, %v183
    %v204 = vadd.f32 %v200, %v188
    %v205 = vadd.f32 %v200, %v193
    %vm206 = vcmask 261120
    %v207 = vsel %vm206, %v202, inf
    %208 = vmin.xlane.f32.xlu0 %v207
    %v209 = vpop.xlane.xlu0 %208
    %v210 = vsel %vm206, %v203, inf
    %211 = vmin.xlane.f32.xlu0 %v210
    %v212 = vpop.xlane.xlu0 %211
    %v213 = vsel %vm206, %v204, inf
    %214 = vmin.xlane.f32.xlu0 %v213
    %v215 = vpop.xlane.xlu0 %214
    %v216 = vsel %vm206, %v205, inf
    %217 = vmin.xlane.f32.xlu0 %v216
    %v218 = vpop.xlane.xlu0 %217
    %v219 = vlaneseq
    %v220 = vand.u32 %v219, 127
    %vm221 = vcmp.eq.f32.partialorder %v202, %v209
    %vm222 = vcmp.eq.f32.partialorder %v203, %v212
    %vm223 = vcmp.eq.f32.partialorder %v204, %v215
    %vm224 = vcmp.eq.f32.partialorder %v205, %v218
    %v225 = vsel %vm221, %v220, 32
    %v226 = vsel %vm222, %v220, 32
    %v227 = vsel %vm223, %v220, 32
    %v228 = vsel %vm224, %v220, 32
    %v229 = vsel %vm206, %v225, 2147483647
    %v230 = vand.u32 %v229, 65535
    %v231 = vshra.s32 %v229, 16
    %v232 = vcvt.s32.f32 %v230
    %v233 = vcvt.s32.f32 %v231
    %234 = vmin.xlane.f32.xlu0 %v233
    %v235 = vpop.xlane.xlu0 %234
    %vm236 = vcmp.eq.f32.partialorder %v233, %v235
    %v237 = vsel %vm236, %v232, inf
    %238 = vmin.xlane.f32.xlu0 %v237
    %v239 = vpop.xlane.xlu0 %238
    %v240 = vcvt.f32.s32 %v239
    %v241 = vcvt.f32.s32 %v235
    %v242 = vshll.u32 %v241, 16
    %v243 = vadd.s32 %v242, %v240
    %v244 = vsel %vm206, %v226, 2147483647
    %v245 = vand.u32 %v244, 65535
    %v246 = vshra.s32 %v244, 16
    %v247 = vcvt.s32.f32 %v245
    %v248 = vcvt.s32.f32 %v246
    %249 = vmin.xlane.f32.xlu0 %v248
    %v250 = vpop.xlane.xlu0 %249
    %vm251 = vcmp.eq.f32.partialorder %v248, %v250
    %v252 = vsel %vm251, %v247, inf
    %253 = vmin.xlane.f32.xlu0 %v252
    %v254 = vpop.xlane.xlu0 %253
    %v255 = vcvt.f32.s32 %v254
    %v256 = vcvt.f32.s32 %v250
    %v257 = vshll.u32 %v256, 16
    %v258 = vadd.s32 %v257, %v255
    %v259 = vsel %vm206, %v227, 2147483647
    %v260 = vand.u32 %v259, 65535
    %v261 = vshra.s32 %v259, 16
    %v262 = vcvt.s32.f32 %v260
    %v263 = vcvt.s32.f32 %v261
    %264 = vmin.xlane.f32.xlu0 %v263
    %v265 = vpop.xlane.xlu0 %264
    %vm266 = vcmp.eq.f32.partialorder %v263, %v265
    %v267 = vsel %vm266, %v262, inf
    %268 = vmin.xlane.f32.xlu0 %v267
    %v269 = vpop.xlane.xlu0 %268
    %v270 = vcvt.f32.s32 %v269
    %v271 = vcvt.f32.s32 %v265
    %v272 = vshll.u32 %v271, 16
    %v273 = vadd.s32 %v272, %v270
    %v274 = vsel %vm206, %v228, 2147483647
    %v275 = vand.u32 %v274, 65535
    %v276 = vshra.s32 %v274, 16
    %v277 = vcvt.s32.f32 %v275
    %v278 = vcvt.s32.f32 %v276
    %279 = vmin.xlane.f32.xlu0 %v278
    %v280 = vpop.xlane.xlu0 %279
    %vm281 = vcmp.eq.f32.partialorder %v278, %v280
    %v282 = vsel %vm281, %v277, inf
    %283 = vmin.xlane.f32.xlu0 %v282
    %v284 = vpop.xlane.xlu0 %283
    %v285 = vcvt.f32.s32 %v284
    %v286 = vcvt.f32.s32 %v280
    %v287 = vshll.u32 %v286, 16
    %v288 = vadd.s32 %v287, %v285
    %vm289 = vcmask 7168
    %290 = vst.msk [vmem:[%s27] sm:$0xff] %vm289, %v243
    %291 = vst.msk [vmem:[%s27 + $0x8] sm:$0xff] %vm289, %v258
    %292 = vst.msk [vmem:[%s27 + $0x10] sm:$0xff] %vm289, %v273
    %293 = vst.msk [vmem:[%s27 + $0x18] sm:$0xff] %vm289, %v288
    %v294 = vld [vmem:[%s1] sm:$0xff]
    %v295 = vld [vmem:[%s1 + $0x8] sm:$0xff]
    %v296 = vld [vmem:[%s1 + $0x10] sm:$0xff]
    %v297 = vld [vmem:[%s1 + $0x18] sm:$0xff]
    %vm298 = vcmp.ne.s32.totalorder %v294, 0
    %vm299 = vcmp.ne.s32.totalorder %v295, 0
    %vm300 = vcmp.ne.s32.totalorder %v296, 0
    %vm301 = vcmp.ne.s32.totalorder %v297, 0
    %v302 = vsel %vm298, 32, %v243
    %v303 = vsel %vm299, 32, %v258
    %v304 = vsel %vm300, 32, %v273
    %v305 = vsel %vm301, 32, %v288
    %306 = vset.pattern.permute.xlu0 0
    %307 = vperm.xlu0 %306, %v302
    %v308 = vpop.permute.xlu0 %307
    %309 = vset.pattern.permute.xlu0 0
    %310 = vperm.xlu0 %309, %v303
    %v311 = vpop.permute.xlu0 %310
    %312 = vset.pattern.permute.xlu0 0
    %313 = vperm.xlu0 %312, %v304
    %v314 = vpop.permute.xlu0 %313
    %315 = vset.pattern.permute.xlu0 0
    %316 = vperm.xlu0 %315, %v305
    %v317 = vpop.permute.xlu0 %316
    %vm318 = vcmp.eq.s32.totalorder %v308, %v220
    %vm319 = vcmp.eq.s32.totalorder %v311, %v220
    %vm320 = vcmp.eq.s32.totalorder %v314, %v220
    %vm321 = vcmp.eq.s32.totalorder %v317, %v220
    %v322 = vsel %vm318, 1, 0
    %v323 = vsel %vm319, 1, 0
    %v324 = vsel %vm320, 1, 0
    %v325 = vsel %vm321, 1, 0
    %v326 = vcvt.s32.f32 %v322
    %v327 = vcvt.s32.f32 %v323
    %v328 = vcvt.s32.f32 %v324
    %v329 = vcvt.s32.f32 %v325
    %v330 = vpack.c.bf16 %v327, %v326
    %v331 = vpack.c.bf16 %v329, %v328
    %v332 = vld [vmem:[%s4] sm:$0xf]
    %v333 = vld [vmem:[%s4 + $0x4] sm:$0xf]
    %v334 = vld [vmem:[%s4 + $0x8] sm:$0xf]
    %v335 = vld [vmem:[%s4 + $0xc] sm:$0xf]
    %v336 = vld [vmem:[%s4 + $0x10] sm:$0xf]
    %v337 = vld [vmem:[%s4 + $0x14] sm:$0xf]
    %v338 = vld [vmem:[%s4 + $0x18] sm:$0xf]
    %v339 = vld [vmem:[%s4 + $0x1c] sm:$0xf]
    %v340 = vld [vmem:[%s4 + $0x20] sm:$0xf]
    %v341 = vld [vmem:[%s4 + $0x24] sm:$0xf]
    %v342 = vld [vmem:[%s4 + $0x28] sm:$0xf]
    %v343 = vld [vmem:[%s4 + $0x2c] sm:$0xf]
    %v344 = vld [vmem:[%s4 + $0x30] sm:$0xf]
    %v345 = vld [vmem:[%s4 + $0x34] sm:$0xf]
    %v346 = vld [vmem:[%s4 + $0x38] sm:$0xf]
    %v347 = vld [vmem:[%s4 + $0x3c] sm:$0xf]
    %v348 = vld [vmem:[%s5] sm:$0xff]
    %v349 = vld [vmem:[%s5 + $0x8] sm:$0xff]
    %v350 = vld [vmem:[%s5 + $0x10] sm:$0xff]
    %v351 = vld [vmem:[%s5 + $0x18] sm:$0xff]
    %v368 = vunpack.c.l.b16 %v332
    %v369 = vunpack.c.l.b16 %v333
    %v370 = vunpack.c.l.b16 %v334
    %v371 = vunpack.c.l.b16 %v335
    %v372 = vunpack.c.l.b16 %v336
    %v373 = vunpack.c.l.b16 %v337
    %v374 = vunpack.c.l.b16 %v338
    %v375 = vunpack.c.l.b16 %v339
    %v376 = vunpack.c.l.b16 %v340
    %v377 = vunpack.c.l.b16 %v341
    %v378 = vunpack.c.l.b16 %v342
    %v379 = vunpack.c.l.b16 %v343
    %v380 = vunpack.c.l.b16 %v344
    %v381 = vunpack.c.l.b16 %v345
    %v382 = vunpack.c.l.b16 %v346
    %v383 = vunpack.c.l.b16 %v347
    %v384 = vpack.c.b16 %v369, %v368
    %v385 = vpack.c.b16 %v371, %v370
    %v386 = vpack.c.b16 %v373, %v372
    %v387 = vpack.c.b16 %v375, %v374
    %v388 = vpack.c.b16 %v377, %v376
    %v389 = vpack.c.b16 %v379, %v378
    %v390 = vpack.c.b16 %v381, %v380
    %v391 = vpack.c.b16 %v383, %v382
    %400 = vmatprep.subr.bf16.mxu0 0
    %401 = vmatpush1.bf16.msra.mxu0 %v391
    %402 = vmatprep.subr.bf16.mxu0 0
    %403 = vmatpush1.bf16.msra.mxu0 %v390
    %404 = vmatprep.subr.bf16.mxu0 0
    %405 = vmatpush1.bf16.msra.mxu0 %v389
    %406 = vmatprep.subr.bf16.mxu0 0
    %407 = vmatpush1.bf16.msra.mxu0 %v388
    %408 = vmatprep.subr.bf16.mxu0 0
    %409 = vmatpush1.bf16.msra.mxu0 %v387
    %410 = vmatprep.subr.bf16.mxu0 0
    %411 = vmatpush1.bf16.msra.mxu0 %v386
    %412 = vmatprep.subr.bf16.mxu0 0
    %413 = vmatpush1.bf16.msra.mxu0 %v385
    %414 = vmatprep.subr.bf16.mxu0 0
    %415 = vmatpush1.bf16.msra.mxu0 %v384
    %416 = vmatprep.subr.bf16.mxu0 0
    %417 = vmatpush2.bf16.msra.mxu0 0
    %418 = vmatprep.subr.bf16.mxu0 0
    %419 = vmatpush2.bf16.msra.mxu0 0
    %420 = vmatprep.subr.bf16.mxu0 0
    %421 = vmatpush2.bf16.msra.mxu0 0
    %422 = vmatprep.subr.bf16.mxu0 0
    %423 = vmatpush2.bf16.msra.mxu0 0
    %424 = vmatprep.subr.bf16.mxu0 0
    %425 = vmatpush2.bf16.msra.mxu0 0
    %426 = vmatprep.subr.bf16.mxu0 0
    %427 = vmatpush2.bf16.msra.mxu0 0
    %428 = vmatprep.subr.bf16.mxu0 0
    %429 = vmatpush2.bf16.msra.mxu0 0
    %430 = vmatprep.subr.bf16.mxu0 0
    %431 = vmatpush2.bf16.msra.mxu0 0
    %432 = vmatprep.mubr.bf16.mxu0 0
    %433 = vmatmul.mubr.bf16.gmra.mxu0 %v330
    %v434 = vpop.f32.mrf.mxu0
    %v435 = vadd.f32 %v348, %v434
    %v436 = vpop.f32.mrf.mxu0
    %v437 = vpop.f32.mrf.mxu0
    %v438 = vadd.f32 %v349, %v437
    %v439 = vpop.f32.mrf.mxu0
    %440 = vmatprep.mubr.bf16.mxu0 0
    %441 = vmatmul.mubr.bf16.gmra.mxu0 %v331
    %v442 = vpop.f32.mrf.mxu0
    %v443 = vadd.f32 %v350, %v442
    %v444 = vpop.f32.mrf.mxu0
    %v445 = vpop.f32.mrf.mxu0
    %v446 = vadd.f32 %v351, %v445
    %v447 = vpop.f32.mrf.mxu0
    %448 = vdwg.mxu0
    %v449 = vld [vmem:[%s6] sm:$0x1]
    %v450 = vld [vmem:[%s7] sm:$0x1]
    %v451 = vsel %vm206, %v435, 0.0
    %452 = vadd.xlane.f32.xlu0 %v451
    %v453 = vpop.xlane.xlu0 %452
    %v454 = vsel %vm206, %v438, 0.0
    %455 = vadd.xlane.f32.xlu0 %v454
    %v456 = vpop.xlane.xlu0 %455
    %v457 = vsel %vm206, %v443, 0.0
    %458 = vadd.xlane.f32.xlu0 %v457
    %v459 = vpop.xlane.xlu0 %458
    %v460 = vsel %vm206, %v446, 0.0
    %461 = vadd.xlane.f32.xlu0 %v460
    %v462 = vpop.xlane.xlu0 %461
    %v463 = vrcp.pop 32.0
    %v464 = vmul.f32 %v453, %v463
    %v465 = vmul.f32 %v456, %v463
    %v466 = vmul.f32 %v459, %v463
    %v467 = vmul.f32 %v462, %v463
    %v468 = vsub.f32 %v435, %v464
    %v469 = vsub.f32 %v438, %v465
    %v470 = vsub.f32 %v443, %v466
    %v471 = vsub.f32 %v446, %v467
    %v472 = vmul.f32 %v468, %v468
    %v473 = vmul.f32 %v469, %v469
    %v474 = vmul.f32 %v470, %v470
    %v475 = vmul.f32 %v471, %v471
    %v476 = vsel %vm206, %v472, 0.0
    %477 = vadd.xlane.f32.xlu0 %v476
    %v478 = vpop.xlane.xlu0 %477
    %v479 = vsel %vm206, %v473, 0.0
    %480 = vadd.xlane.f32.xlu0 %v479
    %v481 = vpop.xlane.xlu0 %480
    %v482 = vsel %vm206, %v474, 0.0
    %483 = vadd.xlane.f32.xlu0 %v482
    %v484 = vpop.xlane.xlu0 %483
    %v485 = vsel %vm206, %v475, 0.0
    %486 = vadd.xlane.f32.xlu0 %v485
    %v487 = vpop.xlane.xlu0 %486
    %v488 = vmul.f32 %v478, %v463
    %v489 = vmul.f32 %v481, %v463
    %v490 = vmul.f32 %v484, %v463
    %v491 = vmul.f32 %v487, %v463
    %v492 = vadd.f32 %v488, 1e-05
    %v493 = vadd.f32 %v489, 1e-05
    %v494 = vadd.f32 %v490, 1e-05
    %v495 = vadd.f32 %v491, 1e-05
    %v496 = vrsqrt.pop %v492
    %v497 = vrsqrt.pop %v493
    %v498 = vrsqrt.pop %v494
    %v499 = vrsqrt.pop %v495
    %v500 = vmul.f32 %v468, %v496
    %v501 = vmul.f32 %v469, %v497
    %v502 = vmul.f32 %v470, %v498
    %v503 = vmul.f32 %v471, %v499
    %v505 = vlaneseq
    %v506 = vshrl.u32 %v505, 7
    %v507 = vsub.s32 0, %v506
    %v508 = vrot.slane %v449, %v507
    %v510 = vmul.f32 %v500, %v508
    %v511 = vmul.f32 %v501, %v508
    %v512 = vmul.f32 %v502, %v508
    %v513 = vmul.f32 %v503, %v508
    %v515 = vlaneseq
    %v516 = vshrl.u32 %v515, 7
    %v517 = vsub.s32 0, %v516
    %v518 = vrot.slane %v450, %v517
    %v520 = vadd.f32 %v510, %v518
    %v521 = vadd.f32 %v511, %v518
    %v522 = vadd.f32 %v512, %v518
    %v523 = vadd.f32 %v513, %v518
    %v524 = vpack.c.bf16 %v521, %v520
    %v525 = vpack.c.bf16 %v523, %v522
    %v526 = vld [vmem:[%s8] sm:$0xf]
    %v527 = vld [vmem:[%s8 + $0x4] sm:$0xf]
    %v528 = vld [vmem:[%s8 + $0x8] sm:$0xf]
    %v529 = vld [vmem:[%s8 + $0xc] sm:$0xf]
    %v530 = vld [vmem:[%s9] sm:$0x1]
    %v532 = vlaneseq
    %v533 = vshrl.u32 %v532, 7
    %v534 = vsub.s32 0, %v533
    %v535 = vrot.slane %v530, %v534
    %v541 = vunpack.c.l.b16 %v526
    %v542 = vunpack.c.l.b16 %v527
    %v543 = vunpack.c.l.b16 %v528
    %v544 = vunpack.c.l.b16 %v529
    %v545 = vpack.c.b16 %v542, %v541
    %v546 = vpack.c.b16 %v544, %v543
    %v550 = vsel %vm206, %v524, 0
    %v553 = vsel %vm206, %v525, 0
    %555 = vmatprep.subr.bf16.mxu0 0
    %556 = vmatpush1.bf16.msra.mxu0 0
    %557 = vmatprep.subr.bf16.mxu0 0
    %558 = vmatpush1.bf16.msra.mxu0 0
    %559 = vmatprep.subr.bf16.mxu0 0
    %560 = vmatpush1.bf16.msra.mxu0 0
    %561 = vmatprep.subr.bf16.mxu0 0
    %562 = vmatpush1.bf16.msra.mxu0 0
    %563 = vmatprep.subr.bf16.mxu0 0
    %564 = vmatpush1.bf16.msra.mxu0 0
    %565 = vmatprep.subr.bf16.mxu0 0
    %566 = vmatpush1.bf16.msra.mxu0 0
    %567 = vmatprep.subr.bf16.mxu0 0
    %568 = vmatpush1.bf16.msra.mxu0 %v546
    %569 = vmatprep.subr.bf16.mxu0 0
    %570 = vmatpush1.bf16.msra.mxu0 %v545
    %571 = vmatprep.subr.bf16.mxu0 0
    %572 = vmatpush2.bf16.msra.mxu0 0
    %573 = vmatprep.subr.bf16.mxu0 0
    %574 = vmatpush2.bf16.msra.mxu0 0
    %575 = vmatprep.subr.bf16.mxu0 0
    %576 = vmatpush2.bf16.msra.mxu0 0
    %577 = vmatprep.subr.bf16.mxu0 0
    %578 = vmatpush2.bf16.msra.mxu0 0
    %579 = vmatprep.subr.bf16.mxu0 0
    %580 = vmatpush2.bf16.msra.mxu0 0
    %581 = vmatprep.subr.bf16.mxu0 0
    %582 = vmatpush2.bf16.msra.mxu0 0
    %583 = vmatprep.subr.bf16.mxu0 0
    %584 = vmatpush2.bf16.msra.mxu0 0
    %585 = vmatprep.subr.bf16.mxu0 0
    %586 = vmatpush2.bf16.msra.mxu0 0
    %587 = vmatprep.mubr.bf16.mxu0 0
    %588 = vmatmul.mubr.bf16.gmra.mxu0 %v550
    %v589 = vpop.f32.mrf.mxu0
    %v590 = vadd.f32 %v535, %v589
    %v591 = vpop.f32.mrf.mxu0
    %v592 = vpop.f32.mrf.mxu0
    %v593 = vadd.f32 %v535, %v592
    %v594 = vpop.f32.mrf.mxu0
    %595 = vmatprep.mubr.bf16.mxu0 0
    %596 = vmatmul.mubr.bf16.gmra.mxu0 %v553
    %v597 = vpop.f32.mrf.mxu0
    %v598 = vadd.f32 %v535, %v597
    %v599 = vpop.f32.mrf.mxu0
    %v600 = vpop.f32.mrf.mxu0
    %v601 = vadd.f32 %v535, %v600
    %v602 = vpop.f32.mrf.mxu0
    %603 = vdwg.mxu0
    %v604 = vld [vmem:[%s10] sm:$0xf]
    %v605 = vld [vmem:[%s10 + $0x4] sm:$0xf]
    %v606 = vld [vmem:[%s10 + $0x8] sm:$0xf]
    %v607 = vld [vmem:[%s10 + $0xc] sm:$0xf]
    %v608 = vld [vmem:[%s11] sm:$0x1]
    %v610 = vlaneseq
    %v611 = vshrl.u32 %v610, 7
    %v612 = vsub.s32 0, %v611
    %v613 = vrot.slane %v608, %v612
    %v619 = vunpack.c.l.b16 %v604
    %v620 = vunpack.c.l.b16 %v605
    %v621 = vunpack.c.l.b16 %v606
    %v622 = vunpack.c.l.b16 %v607
    %v623 = vpack.c.b16 %v620, %v619
    %v624 = vpack.c.b16 %v622, %v621
    %627 = vmatprep.subr.bf16.mxu0 0
    %628 = vmatpush1.bf16.msra.mxu0 0
    %629 = vmatprep.subr.bf16.mxu0 0
    %630 = vmatpush1.bf16.msra.mxu0 0
    %631 = vmatprep.subr.bf16.mxu0 0
    %632 = vmatpush1.bf16.msra.mxu0 0
    %633 = vmatprep.subr.bf16.mxu0 0
    %634 = vmatpush1.bf16.msra.mxu0 0
    %635 = vmatprep.subr.bf16.mxu0 0
    %636 = vmatpush1.bf16.msra.mxu0 0
    %637 = vmatprep.subr.bf16.mxu0 0
    %638 = vmatpush1.bf16.msra.mxu0 0
    %639 = vmatprep.subr.bf16.mxu0 0
    %640 = vmatpush1.bf16.msra.mxu0 %v624
    %641 = vmatprep.subr.bf16.mxu0 0
    %642 = vmatpush1.bf16.msra.mxu0 %v623
    %643 = vmatprep.subr.bf16.mxu0 0
    %644 = vmatpush2.bf16.msra.mxu0 0
    %645 = vmatprep.subr.bf16.mxu0 0
    %646 = vmatpush2.bf16.msra.mxu0 0
    %647 = vmatprep.subr.bf16.mxu0 0
    %648 = vmatpush2.bf16.msra.mxu0 0
    %649 = vmatprep.subr.bf16.mxu0 0
    %650 = vmatpush2.bf16.msra.mxu0 0
    %651 = vmatprep.subr.bf16.mxu0 0
    %652 = vmatpush2.bf16.msra.mxu0 0
    %653 = vmatprep.subr.bf16.mxu0 0
    %654 = vmatpush2.bf16.msra.mxu0 0
    %655 = vmatprep.subr.bf16.mxu0 0
    %656 = vmatpush2.bf16.msra.mxu0 0
    %657 = vmatprep.subr.bf16.mxu0 0
    %658 = vmatpush2.bf16.msra.mxu0 0
    %659 = vmatprep.mubr.bf16.mxu0 0
    %660 = vmatmul.mubr.bf16.gmra.mxu0 %v550
    %v661 = vpop.f32.mrf.mxu0
    %v662 = vadd.f32 %v613, %v661
    %v663 = vpop.f32.mrf.mxu0
    %v664 = vpop.f32.mrf.mxu0
    %v665 = vadd.f32 %v613, %v664
    %v666 = vpop.f32.mrf.mxu0
    %667 = vmatprep.mubr.bf16.mxu0 0
    %668 = vmatmul.mubr.bf16.gmra.mxu0 %v553
    %v669 = vpop.f32.mrf.mxu0
    %v670 = vadd.f32 %v613, %v669
    %v671 = vpop.f32.mrf.mxu0
    %v672 = vpop.f32.mrf.mxu0
    %v673 = vadd.f32 %v613, %v672
    %v674 = vpop.f32.mrf.mxu0
    %675 = vdwg.mxu0
    %v676 = vld [vmem:[%s12] sm:$0xf]
    %v677 = vld [vmem:[%s12 + $0x4] sm:$0xf]
    %v678 = vld [vmem:[%s12 + $0x8] sm:$0xf]
    %v679 = vld [vmem:[%s12 + $0xc] sm:$0xf]
    %v680 = vld [vmem:[%s13] sm:$0x1]
    %v682 = vlaneseq
    %v683 = vshrl.u32 %v682, 7
    %v684 = vsub.s32 0, %v683
    %v685 = vrot.slane %v680, %v684
    %v691 = vunpack.c.l.b16 %v676
    %v692 = vunpack.c.l.b16 %v677
    %v693 = vunpack.c.l.b16 %v678
    %v694 = vunpack.c.l.b16 %v679
    %v695 = vpack.c.b16 %v692, %v691
    %v696 = vpack.c.b16 %v694, %v693
    %699 = vmatprep.subr.bf16.mxu0 0
    %700 = vmatpush1.bf16.msra.mxu0 0
    %701 = vmatprep.subr.bf16.mxu0 0
    %702 = vmatpush1.bf16.msra.mxu0 0
    %703 = vmatprep.subr.bf16.mxu0 0
    %704 = vmatpush1.bf16.msra.mxu0 0
    %705 = vmatprep.subr.bf16.mxu0 0
    %706 = vmatpush1.bf16.msra.mxu0 0
    %707 = vmatprep.subr.bf16.mxu0 0
    %708 = vmatpush1.bf16.msra.mxu0 0
    %709 = vmatprep.subr.bf16.mxu0 0
    %710 = vmatpush1.bf16.msra.mxu0 0
    %711 = vmatprep.subr.bf16.mxu0 0
    %712 = vmatpush1.bf16.msra.mxu0 %v696
    %713 = vmatprep.subr.bf16.mxu0 0
    %714 = vmatpush1.bf16.msra.mxu0 %v695
    %715 = vmatprep.subr.bf16.mxu0 0
    %716 = vmatpush2.bf16.msra.mxu0 0
    %717 = vmatprep.subr.bf16.mxu0 0
    %718 = vmatpush2.bf16.msra.mxu0 0
    %719 = vmatprep.subr.bf16.mxu0 0
    %720 = vmatpush2.bf16.msra.mxu0 0
    %721 = vmatprep.subr.bf16.mxu0 0
    %722 = vmatpush2.bf16.msra.mxu0 0
    %723 = vmatprep.subr.bf16.mxu0 0
    %724 = vmatpush2.bf16.msra.mxu0 0
    %725 = vmatprep.subr.bf16.mxu0 0
    %726 = vmatpush2.bf16.msra.mxu0 0
    %727 = vmatprep.subr.bf16.mxu0 0
    %728 = vmatpush2.bf16.msra.mxu0 0
    %729 = vmatprep.subr.bf16.mxu0 0
    %730 = vmatpush2.bf16.msra.mxu0 0
    %731 = vmatprep.mubr.bf16.mxu0 0
    %732 = vmatmul.mubr.bf16.gmra.mxu0 %v550
    %v733 = vpop.f32.mrf.mxu0
    %v734 = vadd.f32 %v685, %v733
    %v735 = vpop.f32.mrf.mxu0
    %v736 = vpop.f32.mrf.mxu0
    %v737 = vadd.f32 %v685, %v736
    %v738 = vpop.f32.mrf.mxu0
    %739 = vmatprep.mubr.bf16.mxu0 0
    %740 = vmatmul.mubr.bf16.gmra.mxu0 %v553
    %v741 = vpop.f32.mrf.mxu0
    %v742 = vadd.f32 %v685, %v741
    %v743 = vpop.f32.mrf.mxu0
    %v744 = vpop.f32.mrf.mxu0
    %v745 = vadd.f32 %v685, %v744
    %v746 = vpop.f32.mrf.mxu0
    %747 = vdwg.mxu0
    %v748 = vpack.c.bf16 %v593, %v590
    %v749 = vpack.c.bf16 %v601, %v598
    %v750 = vpack.c.bf16 %v665, %v662
    %v751 = vpack.c.bf16 %v673, %v670
    %v752 = vpack.c.bf16 %v737, %v734
    %v753 = vpack.c.bf16 %v745, %v742
    %vm754 = vcmask 130048
    %v756 = vsel %vm754, %v748, 0
    %v759 = vsel %vm754, %v750, 0
    %761 = vmatprep.subr.bf16.mxu0 0
    %762 = vmatpush1.bf16.xpose.msra.mxu0 0
    %763 = vmatprep.subr.bf16.mxu0 0
    %764 = vmatpush1.bf16.xpose.msra.mxu0 0
    %765 = vmatprep.subr.bf16.mxu0 0
    %766 = vmatpush1.bf16.xpose.msra.mxu0 0
    %767 = vmatprep.subr.bf16.mxu0 0
    %768 = vmatpush1.bf16.xpose.msra.mxu0 0
    %769 = vmatprep.subr.bf16.mxu0 0
    %770 = vmatpush1.bf16.xpose.msra.mxu0 0
    %771 = vmatprep.subr.bf16.mxu0 0
    %772 = vmatpush1.bf16.xpose.msra.mxu0 0
    %773 = vmatprep.subr.bf16.mxu0 0
    %774 = vmatpush1.bf16.xpose.msra.mxu0 0
    %775 = vmatprep.subr.bf16.mxu0 0
    %776 = vmatpush1.bf16.xpose.msra.mxu0 %v759
    %777 = vmatprep.subr.bf16.mxu0 0
    %778 = vmatpush2.bf16.xpose.msra.mxu0 0
    %779 = vmatprep.subr.bf16.mxu0 0
    %780 = vmatpush2.bf16.xpose.msra.mxu0 0
    %781 = vmatprep.subr.bf16.mxu0 0
    %782 = vmatpush2.bf16.xpose.msra.mxu0 0
    %783 = vmatprep.subr.bf16.mxu0 0
    %784 = vmatpush2.bf16.xpose.msra.mxu0 0
    %785 = vmatprep.subr.bf16.mxu0 0
    %786 = vmatpush2.bf16.xpose.msra.mxu0 0
    %787 = vmatprep.subr.bf16.mxu0 0
    %788 = vmatpush2.bf16.xpose.msra.mxu0 0
    %789 = vmatprep.subr.bf16.mxu0 0
    %790 = vmatpush2.bf16.xpose.msra.mxu0 0
    %791 = vmatprep.subr.bf16.mxu0 0
    %792 = vmatpush2.bf16.xpose.msra.mxu0 0
    %793 = vmatprep.mubr.bf16.mxu0 0
    %794 = vmatmul.mubr.bf16.gmra.mxu0 %v756
    %v795 = vpop.f32.mrf.mxu0
    %v796 = vadd.f32 0.0, %v795
    %v797 = vpop.f32.mrf.mxu0
    %v798 = vpop.f32.mrf.mxu0
    %v799 = vadd.f32 0.0, %v798
    %v800 = vpop.f32.mrf.mxu0
    %801 = vdwg.mxu0
    %v803 = vsel %vm754, %v749, 0
    %v806 = vsel %vm754, %v751, 0
    %808 = vmatprep.subr.bf16.mxu0 0
    %809 = vmatpush1.bf16.xpose.msra.mxu0 0
    %810 = vmatprep.subr.bf16.mxu0 0
    %811 = vmatpush1.bf16.xpose.msra.mxu0 0
    %812 = vmatprep.subr.bf16.mxu0 0
    %813 = vmatpush1.bf16.xpose.msra.mxu0 0
    %814 = vmatprep.subr.bf16.mxu0 0
    %815 = vmatpush1.bf16.xpose.msra.mxu0 0
    %816 = vmatprep.subr.bf16.mxu0 0
    %817 = vmatpush1.bf16.xpose.msra.mxu0 0
    %818 = vmatprep.subr.bf16.mxu0 0
    %819 = vmatpush1.bf16.xpose.msra.mxu0 0
    %820 = vmatprep.subr.bf16.mxu0 0
    %821 = vmatpush1.bf16.xpose.msra.mxu0 0
    %822 = vmatprep.subr.bf16.mxu0 0
    %823 = vmatpush1.bf16.xpose.msra.mxu0 %v806
    %824 = vmatprep.subr.bf16.mxu0 0
    %825 = vmatpush2.bf16.xpose.msra.mxu0 0
    %826 = vmatprep.subr.bf16.mxu0 0
    %827 = vmatpush2.bf16.xpose.msra.mxu0 0
    %828 = vmatprep.subr.bf16.mxu0 0
    %829 = vmatpush2.bf16.xpose.msra.mxu0 0
    %830 = vmatprep.subr.bf16.mxu0 0
    %831 = vmatpush2.bf16.xpose.msra.mxu0 0
    %832 = vmatprep.subr.bf16.mxu0 0
    %833 = vmatpush2.bf16.xpose.msra.mxu0 0
    %834 = vmatprep.subr.bf16.mxu0 0
    %835 = vmatpush2.bf16.xpose.msra.mxu0 0
    %836 = vmatprep.subr.bf16.mxu0 0
    %837 = vmatpush2.bf16.xpose.msra.mxu0 0
    %838 = vmatprep.subr.bf16.mxu0 0
    %839 = vmatpush2.bf16.xpose.msra.mxu0 0
    %840 = vmatprep.mubr.bf16.mxu0 0
    %841 = vmatmul.mubr.bf16.gmra.mxu0 %v803
    %v842 = vpop.f32.mrf.mxu0
    %v843 = vadd.f32 0.0, %v842
    %v844 = vpop.f32.mrf.mxu0
    %v845 = vpop.f32.mrf.mxu0
    %v846 = vadd.f32 0.0, %v845
    %v847 = vpop.f32.mrf.mxu0
    %848 = vdwg.mxu0
    %v849 = vmul.f32 %v796, 0.25
    %v850 = vmul.f32 %v799, 0.25
    %v851 = vmul.f32 %v843, 0.25
    %v852 = vmul.f32 %v846, 0.25
    %v853 = vsel %vm754, %v849, -inf
    %854 = vmax.xlane.f32.xlu0 %v853
    %v855 = vpop.xlane.xlu0 %854
    %v856 = vsel %vm754, %v850, -inf
    %857 = vmax.xlane.f32.xlu0 %v856
    %v858 = vpop.xlane.xlu0 %857
    %v859 = vsel %vm754, %v851, -inf
    %860 = vmax.xlane.f32.xlu0 %v859
    %v861 = vpop.xlane.xlu0 %860
    %v862 = vsel %vm754, %v852, -inf
    %863 = vmax.xlane.f32.xlu0 %v862
    %v864 = vpop.xlane.xlu0 %863
    %v865 = vsub.f32 %v849, %v855
    %v866 = vsub.f32 %v850, %v858
    %v867 = vsub.f32 %v851, %v861
    %v868 = vsub.f32 %v852, %v864
    %v869 = vmul.f32 %v865, 1.442695
    %v870 = vpow.pop %v869
    %v871 = vmul.f32 %v866, 1.442695
    %v872 = vpow.pop %v871
    %v873 = vmul.f32 %v867, 1.442695
    %v874 = vpow.pop %v873
    %v875 = vmul.f32 %v868, 1.442695
    %v876 = vpow.pop %v875
    %v877 = vsel %vm754, %v870, 0.0
    %878 = vadd.xlane.f32.xlu0 %v877
    %v879 = vpop.xlane.xlu0 %878
    %v880 = vsel %vm754, %v872, 0.0
    %881 = vadd.xlane.f32.xlu0 %v880
    %v882 = vpop.xlane.xlu0 %881
    %v883 = vsel %vm754, %v874, 0.0
    %884 = vadd.xlane.f32.xlu0 %v883
    %v885 = vpop.xlane.xlu0 %884
    %v886 = vsel %vm754, %v876, 0.0
    %887 = vadd.xlane.f32.xlu0 %v886
    %v888 = vpop.xlane.xlu0 %887
    %v889 = vrcp.pop %v879
    %v890 = vrcp.pop %v882
    %v891 = vrcp.pop %v885
    %v892 = vrcp.pop %v888
    %v893 = vmul.f32 %v870, %v889
    %v894 = vmul.f32 %v872, %v890
    %v895 = vmul.f32 %v874, %v891
    %v896 = vmul.f32 %v876, %v892
    %v897 = vpack.c.bf16 %v894, %v893
    %v898 = vpack.c.bf16 %v896, %v895
    %v900 = vsel %vm754, %v897, 0
    %902 = vmatprep.subr.bf16.mxu0 0
    %903 = vmatpush1.bf16.msra.mxu0 0
    %904 = vmatprep.subr.bf16.mxu0 0
    %905 = vmatpush1.bf16.msra.mxu0 0
    %906 = vmatprep.subr.bf16.mxu0 0
    %907 = vmatpush1.bf16.msra.mxu0 0
    %908 = vmatprep.subr.bf16.mxu0 0
    %909 = vmatpush1.bf16.msra.mxu0 0
    %910 = vmatprep.subr.bf16.mxu0 0
    %911 = vmatpush1.bf16.msra.mxu0 0
    %912 = vmatprep.subr.bf16.mxu0 0
    %913 = vmatpush1.bf16.msra.mxu0 0
    %914 = vmatprep.subr.bf16.mxu0 0
    %915 = vmatpush1.bf16.msra.mxu0 0
    %916 = vmatprep.subr.bf16.mxu0 0
    %917 = vmatpush1.bf16.msra.mxu0 %v752
    %918 = vmatprep.subr.bf16.mxu0 0
    %919 = vmatpush2.bf16.msra.mxu0 0
    %920 = vmatprep.subr.bf16.mxu0 0
    %921 = vmatpush2.bf16.msra.mxu0 0
    %922 = vmatprep.subr.bf16.mxu0 0
    %923 = vmatpush2.bf16.msra.mxu0 0
    %924 = vmatprep.subr.bf16.mxu0 0
    %925 = vmatpush2.bf16.msra.mxu0 0
    %926 = vmatprep.subr.bf16.mxu0 0
    %927 = vmatpush2.bf16.msra.mxu0 0
    %928 = vmatprep.subr.bf16.mxu0 0
    %929 = vmatpush2.bf16.msra.mxu0 0
    %930 = vmatprep.subr.bf16.mxu0 0
    %931 = vmatpush2.bf16.msra.mxu0 0
    %932 = vmatprep.subr.bf16.mxu0 0
    %933 = vmatpush2.bf16.msra.mxu0 0
    %934 = vmatprep.mubr.bf16.mxu0 0
    %935 = vmatmul.mubr.bf16.gmra.mxu0 %v900
    %v936 = vpop.f32.mrf.mxu0
    %v937 = vadd.f32 0.0, %v936
    %v938 = vpop.f32.mrf.mxu0
    %v939 = vpop.f32.mrf.mxu0
    %v940 = vadd.f32 0.0, %v939
    %v941 = vpop.f32.mrf.mxu0
    %942 = vdwg.mxu0
    %v944 = vsel %vm754, %v898, 0
    %946 = vmatprep.subr.bf16.mxu0 0
    %947 = vmatpush1.bf16.msra.mxu0 0
    %948 = vmatprep.subr.bf16.mxu0 0
    %949 = vmatpush1.bf16.msra.mxu0 0
    %950 = vmatprep.subr.bf16.mxu0 0
    %951 = vmatpush1.bf16.msra.mxu0 0
    %952 = vmatprep.subr.bf16.mxu0 0
    %953 = vmatpush1.bf16.msra.mxu0 0
    %954 = vmatprep.subr.bf16.mxu0 0
    %955 = vmatpush1.bf16.msra.mxu0 0
    %956 = vmatprep.subr.bf16.mxu0 0
    %957 = vmatpush1.bf16.msra.mxu0 0
    %958 = vmatprep.subr.bf16.mxu0 0
    %959 = vmatpush1.bf16.msra.mxu0 0
    %960 = vmatprep.subr.bf16.mxu0 0
    %961 = vmatpush1.bf16.msra.mxu0 %v753
    %962 = vmatprep.subr.bf16.mxu0 0
    %963 = vmatpush2.bf16.msra.mxu0 0
    %964 = vmatprep.subr.bf16.mxu0 0
    %965 = vmatpush2.bf16.msra.mxu0 0
    %966 = vmatprep.subr.bf16.mxu0 0
    %967 = vmatpush2.bf16.msra.mxu0 0
    %968 = vmatprep.subr.bf16.mxu0 0
    %969 = vmatpush2.bf16.msra.mxu0 0
    %970 = vmatprep.subr.bf16.mxu0 0
    %971 = vmatpush2.bf16.msra.mxu0 0
    %972 = vmatprep.subr.bf16.mxu0 0
    %973 = vmatpush2.bf16.msra.mxu0 0
    %974 = vmatprep.subr.bf16.mxu0 0
    %975 = vmatpush2.bf16.msra.mxu0 0
    %976 = vmatprep.subr.bf16.mxu0 0
    %977 = vmatpush2.bf16.msra.mxu0 0
    %978 = vmatprep.mubr.bf16.mxu0 0
    %979 = vmatmul.mubr.bf16.gmra.mxu0 %v944
    %v980 = vpop.f32.mrf.mxu0
    %v981 = vadd.f32 0.0, %v980
    %v982 = vpop.f32.mrf.mxu0
    %v983 = vpop.f32.mrf.mxu0
    %v984 = vadd.f32 0.0, %v983
    %v985 = vpop.f32.mrf.mxu0
    %986 = vdwg.mxu0
    %v987 = vpack.c.bf16 %v940, %v937
    %v988 = vpack.c.bf16 %v984, %v981
    %v989 = vld [vmem:[%s14] sm:$0xf]
    %v990 = vld [vmem:[%s14 + $0x4] sm:$0xf]
    %s991 = scalar_lea.vmem %s8, 16
    %v992 = vld [vmem:[%s991] sm:$0xf]
    %v993 = vld [vmem:[%s991 + $0x4] sm:$0xf]
    %v994 = vld [vmem:[%s991 + $0x8] sm:$0xf]
    %v995 = vld [vmem:[%s991 + $0xc] sm:$0xf]
    %s996 = scalar_lea.vmem %s9, 1
    %v997 = vld [vmem:[%s996] sm:$0x1]
    %v999 = vlaneseq
    %v1000 = vshrl.u32 %v999, 7
    %v1001 = vsub.s32 0, %v1000
    %v1002 = vrot.slane %v997, %v1001
    %v1008 = vunpack.c.l.b16 %v992
    %v1009 = vunpack.c.l.b16 %v993
    %v1010 = vunpack.c.l.b16 %v994
    %v1011 = vunpack.c.l.b16 %v995
    %v1012 = vpack.c.b16 %v1009, %v1008
    %v1013 = vpack.c.b16 %v1011, %v1010
    %1016 = vmatprep.subr.bf16.mxu0 0
    %1017 = vmatpush1.bf16.msra.mxu0 0
    %1018 = vmatprep.subr.bf16.mxu0 0
    %1019 = vmatpush1.bf16.msra.mxu0 0
    %1020 = vmatprep.subr.bf16.mxu0 0
    %1021 = vmatpush1.bf16.msra.mxu0 0
    %1022 = vmatprep.subr.bf16.mxu0 0
    %1023 = vmatpush1.bf16.msra.mxu0 0
    %1024 = vmatprep.subr.bf16.mxu0 0
    %1025 = vmatpush1.bf16.msra.mxu0 0
    %1026 = vmatprep.subr.bf16.mxu0 0
    %1027 = vmatpush1.bf16.msra.mxu0 0
    %1028 = vmatprep.subr.bf16.mxu0 0
    %1029 = vmatpush1.bf16.msra.mxu0 %v1013
    %1030 = vmatprep.subr.bf16.mxu0 0
    %1031 = vmatpush1.bf16.msra.mxu0 %v1012
    %1032 = vmatprep.subr.bf16.mxu0 0
    %1033 = vmatpush2.bf16.msra.mxu0 0
    %1034 = vmatprep.subr.bf16.mxu0 0
    %1035 = vmatpush2.bf16.msra.mxu0 0
    %1036 = vmatprep.subr.bf16.mxu0 0
    %1037 = vmatpush2.bf16.msra.mxu0 0
    %1038 = vmatprep.subr.bf16.mxu0 0
    %1039 = vmatpush2.bf16.msra.mxu0 0
    %1040 = vmatprep.subr.bf16.mxu0 0
    %1041 = vmatpush2.bf16.msra.mxu0 0
    %1042 = vmatprep.subr.bf16.mxu0 0
    %1043 = vmatpush2.bf16.msra.mxu0 0
    %1044 = vmatprep.subr.bf16.mxu0 0
    %1045 = vmatpush2.bf16.msra.mxu0 0
    %1046 = vmatprep.subr.bf16.mxu0 0
    %1047 = vmatpush2.bf16.msra.mxu0 0
    %1048 = vmatprep.mubr.bf16.mxu0 0
    %1049 = vmatmul.mubr.bf16.gmra.mxu0 %v550
    %v1050 = vpop.f32.mrf.mxu0
    %v1051 = vadd.f32 %v1002, %v1050
    %v1052 = vpop.f32.mrf.mxu0
    %v1053 = vpop.f32.mrf.mxu0
    %v1054 = vadd.f32 %v1002, %v1053
    %v1055 = vpop.f32.mrf.mxu0
    %1056 = vmatprep.mubr.bf16.mxu0 0
    %1057 = vmatmul.mubr.bf16.gmra.mxu0 %v553
    %v1058 = vpop.f32.mrf.mxu0
    %v1059 = vadd.f32 %v1002, %v1058
    %v1060 = vpop.f32.mrf.mxu0
    %v1061 = vpop.f32.mrf.mxu0
    %v1062 = vadd.f32 %v1002, %v1061
    %v1063 = vpop.f32.mrf.mxu0
    %1064 = vdwg.mxu0
    %s1065 = scalar_lea.vmem %s10, 16
    %v1066 = vld [vmem:[%s1065] sm:$0xf]
    %v1067 = vld [vmem:[%s1065 + $0x4] sm:$0xf]
    %v1068 = vld [vmem:[%s1065 + $0x8] sm:$0xf]
    %v1069 = vld [vmem:[%s1065 + $0xc] sm:$0xf]
    %s1070 = scalar_lea.vmem %s11, 1
    %v1071 = vld [vmem:[%s1070] sm:$0x1]
    %v1073 = vlaneseq
    %v1074 = vshrl.u32 %v1073, 7
    %v1075 = vsub.s32 0, %v1074
    %v1076 = vrot.slane %v1071, %v1075
    %v1082 = vunpack.c.l.b16 %v1066
    %v1083 = vunpack.c.l.b16 %v1067
    %v1084 = vunpack.c.l.b16 %v1068
    %v1085 = vunpack.c.l.b16 %v1069
    %v1086 = vpack.c.b16 %v1083, %v1082
    %v1087 = vpack.c.b16 %v1085, %v1084
    %1090 = vmatprep.subr.bf16.mxu0 0
    %1091 = vmatpush1.bf16.msra.mxu0 0
    %1092 = vmatprep.subr.bf16.mxu0 0
    %1093 = vmatpush1.bf16.msra.mxu0 0
    %1094 = vmatprep.subr.bf16.mxu0 0
    %1095 = vmatpush1.bf16.msra.mxu0 0
    %1096 = vmatprep.subr.bf16.mxu0 0
    %1097 = vmatpush1.bf16.msra.mxu0 0
    %1098 = vmatprep.subr.bf16.mxu0 0
    %1099 = vmatpush1.bf16.msra.mxu0 0
    %1100 = vmatprep.subr.bf16.mxu0 0
    %1101 = vmatpush1.bf16.msra.mxu0 0
    %1102 = vmatprep.subr.bf16.mxu0 0
    %1103 = vmatpush1.bf16.msra.mxu0 %v1087
    %1104 = vmatprep.subr.bf16.mxu0 0
    %1105 = vmatpush1.bf16.msra.mxu0 %v1086
    %1106 = vmatprep.subr.bf16.mxu0 0
    %1107 = vmatpush2.bf16.msra.mxu0 0
    %1108 = vmatprep.subr.bf16.mxu0 0
    %1109 = vmatpush2.bf16.msra.mxu0 0
    %1110 = vmatprep.subr.bf16.mxu0 0
    %1111 = vmatpush2.bf16.msra.mxu0 0
    %1112 = vmatprep.subr.bf16.mxu0 0
    %1113 = vmatpush2.bf16.msra.mxu0 0
    %1114 = vmatprep.subr.bf16.mxu0 0
    %1115 = vmatpush2.bf16.msra.mxu0 0
    %1116 = vmatprep.subr.bf16.mxu0 0
    %1117 = vmatpush2.bf16.msra.mxu0 0
    %1118 = vmatprep.subr.bf16.mxu0 0
    %1119 = vmatpush2.bf16.msra.mxu0 0
    %1120 = vmatprep.subr.bf16.mxu0 0
    %1121 = vmatpush2.bf16.msra.mxu0 0
    %1122 = vmatprep.mubr.bf16.mxu0 0
    %1123 = vmatmul.mubr.bf16.gmra.mxu0 %v550
    %v1124 = vpop.f32.mrf.mxu0
    %v1125 = vadd.f32 %v1076, %v1124
    %v1126 = vpop.f32.mrf.mxu0
    %v1127 = vpop.f32.mrf.mxu0
    %v1128 = vadd.f32 %v1076, %v1127
    %v1129 = vpop.f32.mrf.mxu0
    %1130 = vmatprep.mubr.bf16.mxu0 0
    %1131 = vmatmul.mubr.bf16.gmra.mxu0 %v553
    %v1132 = vpop.f32.mrf.mxu0
    %v1133 = vadd.f32 %v1076, %v1132
    %v1134 = vpop.f32.mrf.mxu0
    %v1135 = vpop.f32.mrf.mxu0
    %v1136 = vadd.f32 %v1076, %v1135
    %v1137 = vpop.f32.mrf.mxu0
    %1138 = vdwg.mxu0
    %s1139 = scalar_lea.vmem %s12, 16
    %v1140 = vld [vmem:[%s1139] sm:$0xf]
    %v1141 = vld [vmem:[%s1139 + $0x4] sm:$0xf]
    %v1142 = vld [vmem:[%s1139 + $0x8] sm:$0xf]
    %v1143 = vld [vmem:[%s1139 + $0xc] sm:$0xf]
    %s1144 = scalar_lea.vmem %s13, 1
    %v1145 = vld [vmem:[%s1144] sm:$0x1]
    %v1147 = vlaneseq
    %v1148 = vshrl.u32 %v1147, 7
    %v1149 = vsub.s32 0, %v1148
    %v1150 = vrot.slane %v1145, %v1149
    %v1156 = vunpack.c.l.b16 %v1140
    %v1157 = vunpack.c.l.b16 %v1141
    %v1158 = vunpack.c.l.b16 %v1142
    %v1159 = vunpack.c.l.b16 %v1143
    %v1160 = vpack.c.b16 %v1157, %v1156
    %v1161 = vpack.c.b16 %v1159, %v1158
    %1164 = vmatprep.subr.bf16.mxu0 0
    %1165 = vmatpush1.bf16.msra.mxu0 0
    %1166 = vmatprep.subr.bf16.mxu0 0
    %1167 = vmatpush1.bf16.msra.mxu0 0
    %1168 = vmatprep.subr.bf16.mxu0 0
    %1169 = vmatpush1.bf16.msra.mxu0 0
    %1170 = vmatprep.subr.bf16.mxu0 0
    %1171 = vmatpush1.bf16.msra.mxu0 0
    %1172 = vmatprep.subr.bf16.mxu0 0
    %1173 = vmatpush1.bf16.msra.mxu0 0
    %1174 = vmatprep.subr.bf16.mxu0 0
    %1175 = vmatpush1.bf16.msra.mxu0 0
    %1176 = vmatprep.subr.bf16.mxu0 0
    %1177 = vmatpush1.bf16.msra.mxu0 %v1161
    %1178 = vmatprep.subr.bf16.mxu0 0
    %1179 = vmatpush1.bf16.msra.mxu0 %v1160
    %1180 = vmatprep.subr.bf16.mxu0 0
    %1181 = vmatpush2.bf16.msra.mxu0 0
    %1182 = vmatprep.subr.bf16.mxu0 0
    %1183 = vmatpush2.bf16.msra.mxu0 0
    %1184 = vmatprep.subr.bf16.mxu0 0
    %1185 = vmatpush2.bf16.msra.mxu0 0
    %1186 = vmatprep.subr.bf16.mxu0 0
    %1187 = vmatpush2.bf16.msra.mxu0 0
    %1188 = vmatprep.subr.bf16.mxu0 0
    %1189 = vmatpush2.bf16.msra.mxu0 0
    %1190 = vmatprep.subr.bf16.mxu0 0
    %1191 = vmatpush2.bf16.msra.mxu0 0
    %1192 = vmatprep.subr.bf16.mxu0 0
    %1193 = vmatpush2.bf16.msra.mxu0 0
    %1194 = vmatprep.subr.bf16.mxu0 0
    %1195 = vmatpush2.bf16.msra.mxu0 0
    %1196 = vmatprep.mubr.bf16.mxu0 0
    %1197 = vmatmul.mubr.bf16.gmra.mxu0 %v550
    %v1198 = vpop.f32.mrf.mxu0
    %v1199 = vadd.f32 %v1150, %v1198
    %v1200 = vpop.f32.mrf.mxu0
    %v1201 = vpop.f32.mrf.mxu0
    %v1202 = vadd.f32 %v1150, %v1201
    %v1203 = vpop.f32.mrf.mxu0
    %1204 = vmatprep.mubr.bf16.mxu0 0
    %1205 = vmatmul.mubr.bf16.gmra.mxu0 %v553
    %v1206 = vpop.f32.mrf.mxu0
    %v1207 = vadd.f32 %v1150, %v1206
    %v1208 = vpop.f32.mrf.mxu0
    %v1209 = vpop.f32.mrf.mxu0
    %v1210 = vadd.f32 %v1150, %v1209
    %v1211 = vpop.f32.mrf.mxu0
    %1212 = vdwg.mxu0
    %v1213 = vpack.c.bf16 %v1054, %v1051
    %v1214 = vpack.c.bf16 %v1062, %v1059
    %v1215 = vpack.c.bf16 %v1128, %v1125
    %v1216 = vpack.c.bf16 %v1136, %v1133
    %v1217 = vpack.c.bf16 %v1202, %v1199
    %v1218 = vpack.c.bf16 %v1210, %v1207
    %v1220 = vsel %vm754, %v1213, 0
    %v1223 = vsel %vm754, %v1215, 0
    %1225 = vmatprep.subr.bf16.mxu0 0
    %1226 = vmatpush1.bf16.xpose.msra.mxu0 0
    %1227 = vmatprep.subr.bf16.mxu0 0
    %1228 = vmatpush1.bf16.xpose.msra.mxu0 0
    %1229 = vmatprep.subr.bf16.mxu0 0
    %1230 = vmatpush1.bf16.xpose.msra.mxu0 0
    %1231 = vmatprep.subr.bf16.mxu0 0
    %1232 = vmatpush1.bf16.xpose.msra.mxu0 0
    %1233 = vmatprep.subr.bf16.mxu0 0
    %1234 = vmatpush1.bf16.xpose.msra.mxu0 0
    %1235 = vmatprep.subr.bf16.mxu0 0
    %1236 = vmatpush1.bf16.xpose.msra.mxu0 0
    %1237 = vmatprep.subr.bf16.mxu0 0
    %1238 = vmatpush1.bf16.xpose.msra.mxu0 0
    %1239 = vmatprep.subr.bf16.mxu0 0
    %1240 = vmatpush1.bf16.xpose.msra.mxu0 %v1223
    %1241 = vmatprep.subr.bf16.mxu0 0
    %1242 = vmatpush2.bf16.xpose.msra.mxu0 0
    %1243 = vmatprep.subr.bf16.mxu0 0
    %1244 = vmatpush2.bf16.xpose.msra.mxu0 0
    %1245 = vmatprep.subr.bf16.mxu0 0
    %1246 = vmatpush2.bf16.xpose.msra.mxu0 0
    %1247 = vmatprep.subr.bf16.mxu0 0
    %1248 = vmatpush2.bf16.xpose.msra.mxu0 0
    %1249 = vmatprep.subr.bf16.mxu0 0
    %1250 = vmatpush2.bf16.xpose.msra.mxu0 0
    %1251 = vmatprep.subr.bf16.mxu0 0
    %1252 = vmatpush2.bf16.xpose.msra.mxu0 0
    %1253 = vmatprep.subr.bf16.mxu0 0
    %1254 = vmatpush2.bf16.xpose.msra.mxu0 0
    %1255 = vmatprep.subr.bf16.mxu0 0
    %1256 = vmatpush2.bf16.xpose.msra.mxu0 0
    %1257 = vmatprep.mubr.bf16.mxu0 0
    %1258 = vmatmul.mubr.bf16.gmra.mxu0 %v1220
    %v1259 = vpop.f32.mrf.mxu0
    %v1260 = vadd.f32 0.0, %v1259
    %v1261 = vpop.f32.mrf.mxu0
    %v1262 = vpop.f32.mrf.mxu0
    %v1263 = vadd.f32 0.0, %v1262
    %v1264 = vpop.f32.mrf.mxu0
    %1265 = vdwg.mxu0
    %v1267 = vsel %vm754, %v1214, 0
    %v1270 = vsel %vm754, %v1216, 0
    %1272 = vmatprep.subr.bf16.mxu0 0
    %1273 = vmatpush1.bf16.xpose.msra.mxu0 0
    %1274 = vmatprep.subr.bf16.mxu0 0
    %1275 = vmatpush1.bf16.xpose.msra.mxu0 0
    %1276 = vmatprep.subr.bf16.mxu0 0
    %1277 = vmatpush1.bf16.xpose.msra.mxu0 0
    %1278 = vmatprep.subr.bf16.mxu0 0
    %1279 = vmatpush1.bf16.xpose.msra.mxu0 0
    %1280 = vmatprep.subr.bf16.mxu0 0
    %1281 = vmatpush1.bf16.xpose.msra.mxu0 0
    %1282 = vmatprep.subr.bf16.mxu0 0
    %1283 = vmatpush1.bf16.xpose.msra.mxu0 0
    %1284 = vmatprep.subr.bf16.mxu0 0
    %1285 = vmatpush1.bf16.xpose.msra.mxu0 0
    %1286 = vmatprep.subr.bf16.mxu0 0
    %1287 = vmatpush1.bf16.xpose.msra.mxu0 %v1270
    %1288 = vmatprep.subr.bf16.mxu0 0
    %1289 = vmatpush2.bf16.xpose.msra.mxu0 0
    %1290 = vmatprep.subr.bf16.mxu0 0
    %1291 = vmatpush2.bf16.xpose.msra.mxu0 0
    %1292 = vmatprep.subr.bf16.mxu0 0
    %1293 = vmatpush2.bf16.xpose.msra.mxu0 0
    %1294 = vmatprep.subr.bf16.mxu0 0
    %1295 = vmatpush2.bf16.xpose.msra.mxu0 0
    %1296 = vmatprep.subr.bf16.mxu0 0
    %1297 = vmatpush2.bf16.xpose.msra.mxu0 0
    %1298 = vmatprep.subr.bf16.mxu0 0
    %1299 = vmatpush2.bf16.xpose.msra.mxu0 0
    %1300 = vmatprep.subr.bf16.mxu0 0
    %1301 = vmatpush2.bf16.xpose.msra.mxu0 0
    %1302 = vmatprep.subr.bf16.mxu0 0
    %1303 = vmatpush2.bf16.xpose.msra.mxu0 0
    %1304 = vmatprep.mubr.bf16.mxu0 0
    %1305 = vmatmul.mubr.bf16.gmra.mxu0 %v1267
    %v1306 = vpop.f32.mrf.mxu0
    %v1307 = vadd.f32 0.0, %v1306
    %v1308 = vpop.f32.mrf.mxu0
    %v1309 = vpop.f32.mrf.mxu0
    %v1310 = vadd.f32 0.0, %v1309
    %v1311 = vpop.f32.mrf.mxu0
    %1312 = vdwg.mxu0
    %v1313 = vmul.f32 %v1260, 0.25
    %v1314 = vmul.f32 %v1263, 0.25
    %v1315 = vmul.f32 %v1307, 0.25
    %v1316 = vmul.f32 %v1310, 0.25
    %v1317 = vsel %vm754, %v1313, -inf
    %1318 = vmax.xlane.f32.xlu0 %v1317
    %v1319 = vpop.xlane.xlu0 %1318
    %v1320 = vsel %vm754, %v1314, -inf
    %1321 = vmax.xlane.f32.xlu0 %v1320
    %v1322 = vpop.xlane.xlu0 %1321
    %v1323 = vsel %vm754, %v1315, -inf
    %1324 = vmax.xlane.f32.xlu0 %v1323
    %v1325 = vpop.xlane.xlu0 %1324
    %v1326 = vsel %vm754, %v1316, -inf
    %1327 = vmax.xlane.f32.xlu0 %v1326
    %v1328 = vpop.xlane.xlu0 %1327
    %v1329 = vsub.f32 %v1313, %v1319
    %v1330 = vsub.f32 %v1314, %v1322
    %v1331 = vsub.f32 %v1315, %v1325
    %v1332 = vsub.f32 %v1316, %v1328
    %v1333 = vmul.f32 %v1329, 1.442695
    %v1334 = vpow.pop %v1333
    %v1335 = vmul.f32 %v1330, 1.442695
    %v1336 = vpow.pop %v1335
    %v1337 = vmul.f32 %v1331, 1.442695
    %v1338 = vpow.pop %v1337
    %v1339 = vmul.f32 %v1332, 1.442695
    %v1340 = vpow.pop %v1339
    %v1341 = vsel %vm754, %v1334, 0.0
    %1342 = vadd.xlane.f32.xlu0 %v1341
    %v1343 = vpop.xlane.xlu0 %1342
    %v1344 = vsel %vm754, %v1336, 0.0
    %1345 = vadd.xlane.f32.xlu0 %v1344
    %v1346 = vpop.xlane.xlu0 %1345
    %v1347 = vsel %vm754, %v1338, 0.0
    %1348 = vadd.xlane.f32.xlu0 %v1347
    %v1349 = vpop.xlane.xlu0 %1348
    %v1350 = vsel %vm754, %v1340, 0.0
    %1351 = vadd.xlane.f32.xlu0 %v1350
    %v1352 = vpop.xlane.xlu0 %1351
    %v1353 = vrcp.pop %v1343
    %v1354 = vrcp.pop %v1346
    %v1355 = vrcp.pop %v1349
    %v1356 = vrcp.pop %v1352
    %v1357 = vmul.f32 %v1334, %v1353
    %v1358 = vmul.f32 %v1336, %v1354
    %v1359 = vmul.f32 %v1338, %v1355
    %v1360 = vmul.f32 %v1340, %v1356
    %v1361 = vpack.c.bf16 %v1358, %v1357
    %v1362 = vpack.c.bf16 %v1360, %v1359
    %v1364 = vsel %vm754, %v1361, 0
    %1366 = vmatprep.subr.bf16.mxu0 0
    %1367 = vmatpush1.bf16.msra.mxu0 0
    %1368 = vmatprep.subr.bf16.mxu0 0
    %1369 = vmatpush1.bf16.msra.mxu0 0
    %1370 = vmatprep.subr.bf16.mxu0 0
    %1371 = vmatpush1.bf16.msra.mxu0 0
    %1372 = vmatprep.subr.bf16.mxu0 0
    %1373 = vmatpush1.bf16.msra.mxu0 0
    %1374 = vmatprep.subr.bf16.mxu0 0
    %1375 = vmatpush1.bf16.msra.mxu0 0
    %1376 = vmatprep.subr.bf16.mxu0 0
    %1377 = vmatpush1.bf16.msra.mxu0 0
    %1378 = vmatprep.subr.bf16.mxu0 0
    %1379 = vmatpush1.bf16.msra.mxu0 0
    %1380 = vmatprep.subr.bf16.mxu0 0
    %1381 = vmatpush1.bf16.msra.mxu0 %v1217
    %1382 = vmatprep.subr.bf16.mxu0 0
    %1383 = vmatpush2.bf16.msra.mxu0 0
    %1384 = vmatprep.subr.bf16.mxu0 0
    %1385 = vmatpush2.bf16.msra.mxu0 0
    %1386 = vmatprep.subr.bf16.mxu0 0
    %1387 = vmatpush2.bf16.msra.mxu0 0
    %1388 = vmatprep.subr.bf16.mxu0 0
    %1389 = vmatpush2.bf16.msra.mxu0 0
    %1390 = vmatprep.subr.bf16.mxu0 0
    %1391 = vmatpush2.bf16.msra.mxu0 0
    %1392 = vmatprep.subr.bf16.mxu0 0
    %1393 = vmatpush2.bf16.msra.mxu0 0
    %1394 = vmatprep.subr.bf16.mxu0 0
    %1395 = vmatpush2.bf16.msra.mxu0 0
    %1396 = vmatprep.subr.bf16.mxu0 0
    %1397 = vmatpush2.bf16.msra.mxu0 0
    %1398 = vmatprep.mubr.bf16.mxu0 0
    %1399 = vmatmul.mubr.bf16.gmra.mxu0 %v1364
    %v1400 = vpop.f32.mrf.mxu0
    %v1401 = vadd.f32 0.0, %v1400
    %v1402 = vpop.f32.mrf.mxu0
    %v1403 = vpop.f32.mrf.mxu0
    %v1404 = vadd.f32 0.0, %v1403
    %v1405 = vpop.f32.mrf.mxu0
    %1406 = vdwg.mxu0
    %v1408 = vsel %vm754, %v1362, 0
    %1410 = vmatprep.subr.bf16.mxu0 0
    %1411 = vmatpush1.bf16.msra.mxu0 0
    %1412 = vmatprep.subr.bf16.mxu0 0
    %1413 = vmatpush1.bf16.msra.mxu0 0
    %1414 = vmatprep.subr.bf16.mxu0 0
    %1415 = vmatpush1.bf16.msra.mxu0 0
    %1416 = vmatprep.subr.bf16.mxu0 0
    %1417 = vmatpush1.bf16.msra.mxu0 0
    %1418 = vmatprep.subr.bf16.mxu0 0
    %1419 = vmatpush1.bf16.msra.mxu0 0
    %1420 = vmatprep.subr.bf16.mxu0 0
    %1421 = vmatpush1.bf16.msra.mxu0 0
    %1422 = vmatprep.subr.bf16.mxu0 0
    %1423 = vmatpush1.bf16.msra.mxu0 0
    %1424 = vmatprep.subr.bf16.mxu0 0
    %1425 = vmatpush1.bf16.msra.mxu0 %v1218
    %1426 = vmatprep.subr.bf16.mxu0 0
    %1427 = vmatpush2.bf16.msra.mxu0 0
    %1428 = vmatprep.subr.bf16.mxu0 0
    %1429 = vmatpush2.bf16.msra.mxu0 0
    %1430 = vmatprep.subr.bf16.mxu0 0
    %1431 = vmatpush2.bf16.msra.mxu0 0
    %1432 = vmatprep.subr.bf16.mxu0 0
    %1433 = vmatpush2.bf16.msra.mxu0 0
    %1434 = vmatprep.subr.bf16.mxu0 0
    %1435 = vmatpush2.bf16.msra.mxu0 0
    %1436 = vmatprep.subr.bf16.mxu0 0
    %1437 = vmatpush2.bf16.msra.mxu0 0
    %1438 = vmatprep.subr.bf16.mxu0 0
    %1439 = vmatpush2.bf16.msra.mxu0 0
    %1440 = vmatprep.subr.bf16.mxu0 0
    %1441 = vmatpush2.bf16.msra.mxu0 0
    %1442 = vmatprep.mubr.bf16.mxu0 0
    %1443 = vmatmul.mubr.bf16.gmra.mxu0 %v1408
    %v1444 = vpop.f32.mrf.mxu0
    %v1445 = vadd.f32 0.0, %v1444
    %v1446 = vpop.f32.mrf.mxu0
    %v1447 = vpop.f32.mrf.mxu0
    %v1448 = vadd.f32 0.0, %v1447
    %v1449 = vpop.f32.mrf.mxu0
    %1450 = vdwg.mxu0
    %v1451 = vpack.c.bf16 %v1404, %v1401
    %v1452 = vpack.c.bf16 %v1448, %v1445
    %s1453 = scalar_lea.vmem %s14, 8
    %v1454 = vld [vmem:[%s1453] sm:$0xf]
    %v1455 = vld [vmem:[%s1453 + $0x4] sm:$0xf]
    %v1458 = vunpack.c.l.b16 %v1454
    %v1459 = vunpack.c.l.b16 %v1455
    %v1460 = vpack.c.b16 %v1459, %v1458
    %v1463 = vsel %vm754, %v1451, 0
    %v1466 = vsel %vm754, %v1452, 0
    %1468 = vmatprep.subr.bf16.mxu0 0
    %1469 = vmatpush1.bf16.msra.mxu0 0
    %1470 = vmatprep.subr.bf16.mxu0 0
    %1471 = vmatpush1.bf16.msra.mxu0 0
    %1472 = vmatprep.subr.bf16.mxu0 0
    %1473 = vmatpush1.bf16.msra.mxu0 0
    %1474 = vmatprep.subr.bf16.mxu0 0
    %1475 = vmatpush1.bf16.msra.mxu0 0
    %1476 = vmatprep.subr.bf16.mxu0 0
    %1477 = vmatpush1.bf16.msra.mxu0 0
    %1478 = vmatprep.subr.bf16.mxu0 0
    %1479 = vmatpush1.bf16.msra.mxu0 0
    %1480 = vmatprep.subr.bf16.mxu0 0
    %1481 = vmatpush1.bf16.msra.mxu0 0
    %1482 = vmatprep.subr.bf16.mxu0 0
    %1483 = vmatpush1.bf16.msra.mxu0 %v1460
    %1484 = vmatprep.subr.bf16.mxu0 0
    %1485 = vmatpush2.bf16.msra.mxu0 0
    %1486 = vmatprep.subr.bf16.mxu0 0
    %1487 = vmatpush2.bf16.msra.mxu0 0
    %1488 = vmatprep.subr.bf16.mxu0 0
    %1489 = vmatpush2.bf16.msra.mxu0 0
    %1490 = vmatprep.subr.bf16.mxu0 0
    %1491 = vmatpush2.bf16.msra.mxu0 0
    %1492 = vmatprep.subr.bf16.mxu0 0
    %1493 = vmatpush2.bf16.msra.mxu0 0
    %1494 = vmatprep.subr.bf16.mxu0 0
    %1495 = vmatpush2.bf16.msra.mxu0 0
    %1496 = vmatprep.subr.bf16.mxu0 0
    %1497 = vmatpush2.bf16.msra.mxu0 0
    %1498 = vmatprep.subr.bf16.mxu0 0
    %1499 = vmatpush2.bf16.msra.mxu0 0
    %1500 = vmatprep.mubr.bf16.mxu0 0
    %1501 = vmatmul.mubr.bf16.gmra.mxu0 %v1463
    %v1502 = vpop.f32.mrf.mxu0
    %v1503 = vadd.f32 0.0, %v1502
    %v1504 = vpop.f32.mrf.mxu0
    %v1505 = vpop.f32.mrf.mxu0
    %v1506 = vadd.f32 0.0, %v1505
    %v1507 = vpop.f32.mrf.mxu0
    %1508 = vmatprep.mubr.bf16.mxu0 0
    %1509 = vmatmul.mubr.bf16.gmra.mxu0 %v1466
    %v1510 = vpop.f32.mrf.mxu0
    %v1511 = vadd.f32 0.0, %v1510
    %v1512 = vpop.f32.mrf.mxu0
    %v1513 = vpop.f32.mrf.mxu0
    %v1514 = vadd.f32 0.0, %v1513
    %v1515 = vpop.f32.mrf.mxu0
    %1516 = vdwg.mxu0
    %v1519 = vunpack.c.l.b16 %v989
    %v1520 = vunpack.c.l.b16 %v990
    %v1521 = vpack.c.b16 %v1520, %v1519
    %v1524 = vsel %vm754, %v987, 0
    %v1527 = vsel %vm754, %v988, 0
    %1529 = vmatprep.subr.bf16.mxu0 0
    %1530 = vmatpush1.bf16.msra.mxu0 0
    %1531 = vmatprep.subr.bf16.mxu0 0
    %1532 = vmatpush1.bf16.msra.mxu0 0
    %1533 = vmatprep.subr.bf16.mxu0 0
    %1534 = vmatpush1.bf16.msra.mxu0 0
    %1535 = vmatprep.subr.bf16.mxu0 0
    %1536 = vmatpush1.bf16.msra.mxu0 0
    %1537 = vmatprep.subr.bf16.mxu0 0
    %1538 = vmatpush1.bf16.msra.mxu0 0
    %1539 = vmatprep.subr.bf16.mxu0 0
    %1540 = vmatpush1.bf16.msra.mxu0 0
    %1541 = vmatprep.subr.bf16.mxu0 0
    %1542 = vmatpush1.bf16.msra.mxu0 0
    %1543 = vmatprep.subr.bf16.mxu0 0
    %1544 = vmatpush1.bf16.msra.mxu0 %v1521
    %1545 = vmatprep.subr.bf16.mxu0 0
    %1546 = vmatpush2.bf16.msra.mxu0 0
    %1547 = vmatprep.subr.bf16.mxu0 0
    %1548 = vmatpush2.bf16.msra.mxu0 0
    %1549 = vmatprep.subr.bf16.mxu0 0
    %1550 = vmatpush2.bf16.msra.mxu0 0
    %1551 = vmatprep.subr.bf16.mxu0 0
    %1552 = vmatpush2.bf16.msra.mxu0 0
    %1553 = vmatprep.subr.bf16.mxu0 0
    %1554 = vmatpush2.bf16.msra.mxu0 0
    %1555 = vmatprep.subr.bf16.mxu0 0
    %1556 = vmatpush2.bf16.msra.mxu0 0
    %1557 = vmatprep.subr.bf16.mxu0 0
    %1558 = vmatpush2.bf16.msra.mxu0 0
    %1559 = vmatprep.subr.bf16.mxu0 0
    %1560 = vmatpush2.bf16.msra.mxu0 0
    %1561 = vmatprep.mubr.bf16.mxu0 0
    %1562 = vmatmul.mubr.bf16.gmra.mxu0 %v1524
    %v1563 = vpop.f32.mrf.mxu0
    %v1564 = vadd.f32 %v1503, %v1563
    %v1565 = vpop.f32.mrf.mxu0
    %v1566 = vpop.f32.mrf.mxu0
    %v1567 = vadd.f32 %v1506, %v1566
    %v1568 = vpop.f32.mrf.mxu0
    %1569 = vmatprep.mubr.bf16.mxu0 0
    %1570 = vmatmul.mubr.bf16.gmra.mxu0 %v1527
    %v1571 = vpop.f32.mrf.mxu0
    %v1572 = vadd.f32 %v1511, %v1571
    %v1573 = vpop.f32.mrf.mxu0
    %v1574 = vpop.f32.mrf.mxu0
    %v1575 = vadd.f32 %v1514, %v1574
    %v1576 = vpop.f32.mrf.mxu0
    %1577 = vdwg.mxu0
    %v1578 = vadd.f32 %v435, %v1564
    %v1579 = vadd.f32 %v438, %v1567
    %v1580 = vadd.f32 %v443, %v1572
    %v1581 = vadd.f32 %v446, %v1575
    %v1582 = vld [vmem:[%s15] sm:$0x1]
    %v1584 = vlaneseq
    %v1585 = vshrl.u32 %v1584, 7
    %v1586 = vsub.s32 0, %v1585
    %v1587 = vrot.slane %v1582, %v1586
    %v1589 = vadd.f32 %v1578, %v1587
    %v1590 = vadd.f32 %v1579, %v1587
    %v1591 = vadd.f32 %v1580, %v1587
    %v1592 = vadd.f32 %v1581, %v1587
    %v1593 = vld [vmem:[%s16] sm:$0x1]
    %v1594 = vld [vmem:[%s17] sm:$0x1]
    %v1595 = vsel %vm206, %v1589, 0.0
    %1596 = vadd.xlane.f32.xlu0 %v1595
    %v1597 = vpop.xlane.xlu0 %1596
    %v1598 = vsel %vm206, %v1590, 0.0
    %1599 = vadd.xlane.f32.xlu0 %v1598
    %v1600 = vpop.xlane.xlu0 %1599
    %v1601 = vsel %vm206, %v1591, 0.0
    %1602 = vadd.xlane.f32.xlu0 %v1601
    %v1603 = vpop.xlane.xlu0 %1602
    %v1604 = vsel %vm206, %v1592, 0.0
    %1605 = vadd.xlane.f32.xlu0 %v1604
    %v1606 = vpop.xlane.xlu0 %1605
    %v1607 = vmul.f32 %v1597, %v463
    %v1608 = vmul.f32 %v1600, %v463
    %v1609 = vmul.f32 %v1603, %v463
    %v1610 = vmul.f32 %v1606, %v463
    %v1611 = vsub.f32 %v1589, %v1607
    %v1612 = vsub.f32 %v1590, %v1608
    %v1613 = vsub.f32 %v1591, %v1609
    %v1614 = vsub.f32 %v1592, %v1610
    %v1615 = vmul.f32 %v1611, %v1611
    %v1616 = vmul.f32 %v1612, %v1612
    %v1617 = vmul.f32 %v1613, %v1613
    %v1618 = vmul.f32 %v1614, %v1614
    %v1619 = vsel %vm206, %v1615, 0.0
    %1620 = vadd.xlane.f32.xlu0 %v1619
    %v1621 = vpop.xlane.xlu0 %1620
    %v1622 = vsel %vm206, %v1616, 0.0
    %1623 = vadd.xlane.f32.xlu0 %v1622
    %v1624 = vpop.xlane.xlu0 %1623
    %v1625 = vsel %vm206, %v1617, 0.0
    %1626 = vadd.xlane.f32.xlu0 %v1625
    %v1627 = vpop.xlane.xlu0 %1626
    %v1628 = vsel %vm206, %v1618, 0.0
    %1629 = vadd.xlane.f32.xlu0 %v1628
    %v1630 = vpop.xlane.xlu0 %1629
    %v1631 = vmul.f32 %v1621, %v463
    %v1632 = vmul.f32 %v1624, %v463
    %v1633 = vmul.f32 %v1627, %v463
    %v1634 = vmul.f32 %v1630, %v463
    %v1635 = vadd.f32 %v1631, 1e-05
    %v1636 = vadd.f32 %v1632, 1e-05
    %v1637 = vadd.f32 %v1633, 1e-05
    %v1638 = vadd.f32 %v1634, 1e-05
    %v1639 = vrsqrt.pop %v1635
    %v1640 = vrsqrt.pop %v1636
    %v1641 = vrsqrt.pop %v1637
    %v1642 = vrsqrt.pop %v1638
    %v1643 = vmul.f32 %v1611, %v1639
    %v1644 = vmul.f32 %v1612, %v1640
    %v1645 = vmul.f32 %v1613, %v1641
    %v1646 = vmul.f32 %v1614, %v1642
    %v1648 = vlaneseq
    %v1649 = vshrl.u32 %v1648, 7
    %v1650 = vsub.s32 0, %v1649
    %v1651 = vrot.slane %v1593, %v1650
    %v1653 = vmul.f32 %v1643, %v1651
    %v1654 = vmul.f32 %v1644, %v1651
    %v1655 = vmul.f32 %v1645, %v1651
    %v1656 = vmul.f32 %v1646, %v1651
    %v1658 = vlaneseq
    %v1659 = vshrl.u32 %v1658, 7
    %v1660 = vsub.s32 0, %v1659
    %v1661 = vrot.slane %v1594, %v1660
    %v1663 = vadd.f32 %v1653, %v1661
    %v1664 = vadd.f32 %v1654, %v1661
    %v1665 = vadd.f32 %v1655, %v1661
    %v1666 = vadd.f32 %v1656, %v1661
    %v1667 = vpack.c.bf16 %v1664, %v1663
    %v1668 = vpack.c.bf16 %v1666, %v1665
    %v1669 = vld [vmem:[%s18] sm:$0xf]
    %v1670 = vld [vmem:[%s18 + $0x4] sm:$0xf]
    %v1671 = vld [vmem:[%s18 + $0x8] sm:$0xf]
    %v1672 = vld [vmem:[%s18 + $0xc] sm:$0xf]
    %v1673 = vld [vmem:[%s19] sm:$0x1]
    %v1675 = vlaneseq
    %v1676 = vshrl.u32 %v1675, 7
    %v1677 = vsub.s32 0, %v1676
    %v1678 = vrot.slane %v1673, %v1677
    %v1684 = vunpack.c.l.b16 %v1669
    %v1685 = vunpack.c.l.b16 %v1670
    %v1686 = vunpack.c.l.b16 %v1671
    %v1687 = vunpack.c.l.b16 %v1672
    %v1688 = vpack.c.b16 %v1685, %v1684
    %v1689 = vpack.c.b16 %v1687, %v1686
    %v1693 = vsel %vm206, %v1667, 0
    %v1696 = vsel %vm206, %v1668, 0
    %1698 = vmatprep.subr.bf16.mxu0 0
    %1699 = vmatpush1.bf16.msra.mxu0 0
    %1700 = vmatprep.subr.bf16.mxu0 0
    %1701 = vmatpush1.bf16.msra.mxu0 0
    %1702 = vmatprep.subr.bf16.mxu0 0
    %1703 = vmatpush1.bf16.msra.mxu0 0
    %1704 = vmatprep.subr.bf16.mxu0 0
    %1705 = vmatpush1.bf16.msra.mxu0 0
    %1706 = vmatprep.subr.bf16.mxu0 0
    %1707 = vmatpush1.bf16.msra.mxu0 0
    %1708 = vmatprep.subr.bf16.mxu0 0
    %1709 = vmatpush1.bf16.msra.mxu0 0
    %1710 = vmatprep.subr.bf16.mxu0 0
    %1711 = vmatpush1.bf16.msra.mxu0 %v1689
    %1712 = vmatprep.subr.bf16.mxu0 0
    %1713 = vmatpush1.bf16.msra.mxu0 %v1688
    %1714 = vmatprep.subr.bf16.mxu0 0
    %1715 = vmatpush2.bf16.msra.mxu0 0
    %1716 = vmatprep.subr.bf16.mxu0 0
    %1717 = vmatpush2.bf16.msra.mxu0 0
    %1718 = vmatprep.subr.bf16.mxu0 0
    %1719 = vmatpush2.bf16.msra.mxu0 0
    %1720 = vmatprep.subr.bf16.mxu0 0
    %1721 = vmatpush2.bf16.msra.mxu0 0
    %1722 = vmatprep.subr.bf16.mxu0 0
    %1723 = vmatpush2.bf16.msra.mxu0 0
    %1724 = vmatprep.subr.bf16.mxu0 0
    %1725 = vmatpush2.bf16.msra.mxu0 0
    %1726 = vmatprep.subr.bf16.mxu0 0
    %1727 = vmatpush2.bf16.msra.mxu0 0
    %1728 = vmatprep.subr.bf16.mxu0 0
    %1729 = vmatpush2.bf16.msra.mxu0 0
    %1730 = vmatprep.mubr.bf16.mxu0 0
    %1731 = vmatmul.mubr.bf16.gmra.mxu0 %v1693
    %v1732 = vpop.f32.mrf.mxu0
    %v1733 = vadd.f32 %v1678, %v1732
    %v1734 = vpop.f32.mrf.mxu0
    %v1735 = vpop.f32.mrf.mxu0
    %v1736 = vadd.f32 %v1678, %v1735
    %v1737 = vpop.f32.mrf.mxu0
    %1738 = vmatprep.mubr.bf16.mxu0 0
    %1739 = vmatmul.mubr.bf16.gmra.mxu0 %v1696
    %v1740 = vpop.f32.mrf.mxu0
    %v1741 = vadd.f32 %v1678, %v1740
    %v1742 = vpop.f32.mrf.mxu0
    %v1743 = vpop.f32.mrf.mxu0
    %v1744 = vadd.f32 %v1678, %v1743
    %v1745 = vpop.f32.mrf.mxu0
    %1746 = vdwg.mxu0
    %v1747 = vmul.f32 %v1733, %v1733
    %v1748 = vmul.f32 %v1736, %v1736
    %v1749 = vmul.f32 %v1741, %v1741
    %v1750 = vmul.f32 %v1744, %v1744
    %v1751 = vmul.f32 %v1733, %v1747
    %v1752 = vmul.f32 %v1736, %v1748
    %v1753 = vmul.f32 %v1741, %v1749
    %v1754 = vmul.f32 %v1744, %v1750
    %v1755 = vmul.f32 %v1751, 0.044715
    %v1756 = vmul.f32 %v1752, 0.044715
    %v1757 = vmul.f32 %v1753, 0.044715
    %v1758 = vmul.f32 %v1754, 0.044715
    %v1759 = vadd.f32 %v1733, %v1755
    %v1760 = vadd.f32 %v1736, %v1756
    %v1761 = vadd.f32 %v1741, %v1757
    %v1762 = vadd.f32 %v1744, %v1758
    %v1763 = vmul.f32 %v1759, 0.7978846
    %v1764 = vmul.f32 %v1760, 0.7978846
    %v1765 = vmul.f32 %v1761, 0.7978846
    %v1766 = vmul.f32 %v1762, 0.7978846
    %v1767 = vtanh.pop %v1763
    %v1768 = vtanh.pop %v1764
    %v1769 = vtanh.pop %v1765
    %v1770 = vtanh.pop %v1766
    %v1771 = vadd.f32 %v1767, 1.0
    %v1772 = vadd.f32 %v1768, 1.0
    %v1773 = vadd.f32 %v1769, 1.0
    %v1774 = vadd.f32 %v1770, 1.0
    %v1775 = vmul.f32 %v1771, 0.5
    %v1776 = vmul.f32 %v1772, 0.5
    %v1777 = vmul.f32 %v1773, 0.5
    %v1778 = vmul.f32 %v1774, 0.5
    %v1779 = vmul.f32 %v1733, %v1775
    %v1780 = vmul.f32 %v1736, %v1776
    %v1781 = vmul.f32 %v1741, %v1777
    %v1782 = vmul.f32 %v1744, %v1778
    %v1783 = vpack.c.bf16 %v1780, %v1779
    %v1784 = vpack.c.bf16 %v1782, %v1781
    %v1785 = vld [vmem:[%s20] sm:$0xf]
    %v1786 = vld [vmem:[%s20 + $0x4] sm:$0xf]
    %v1787 = vld [vmem:[%s20 + $0x8] sm:$0xf]
    %v1788 = vld [vmem:[%s20 + $0xc] sm:$0xf]
    %v1789 = vld [vmem:[%s20 + $0x10] sm:$0xf]
    %v1790 = vld [vmem:[%s20 + $0x14] sm:$0xf]
    %v1791 = vld [vmem:[%s20 + $0x18] sm:$0xf]
    %v1792 = vld [vmem:[%s20 + $0x1c] sm:$0xf]
    %v1793 = vld [vmem:[%s20 + $0x20] sm:$0xf]
    %v1794 = vld [vmem:[%s20 + $0x24] sm:$0xf]
    %v1795 = vld [vmem:[%s20 + $0x28] sm:$0xf]
    %v1796 = vld [vmem:[%s20 + $0x2c] sm:$0xf]
    %v1797 = vld [vmem:[%s20 + $0x30] sm:$0xf]
    %v1798 = vld [vmem:[%s20 + $0x34] sm:$0xf]
    %v1799 = vld [vmem:[%s20 + $0x38] sm:$0xf]
    %v1800 = vld [vmem:[%s20 + $0x3c] sm:$0xf]
    %v1817 = vunpack.c.l.b16 %v1785
    %v1818 = vunpack.c.l.b16 %v1786
    %v1819 = vunpack.c.l.b16 %v1787
    %v1820 = vunpack.c.l.b16 %v1788
    %v1821 = vunpack.c.l.b16 %v1789
    %v1822 = vunpack.c.l.b16 %v1790
    %v1823 = vunpack.c.l.b16 %v1791
    %v1824 = vunpack.c.l.b16 %v1792
    %v1825 = vunpack.c.l.b16 %v1793
    %v1826 = vunpack.c.l.b16 %v1794
    %v1827 = vunpack.c.l.b16 %v1795
    %v1828 = vunpack.c.l.b16 %v1796
    %v1829 = vunpack.c.l.b16 %v1797
    %v1830 = vunpack.c.l.b16 %v1798
    %v1831 = vunpack.c.l.b16 %v1799
    %v1832 = vunpack.c.l.b16 %v1800
    %v1833 = vpack.c.b16 %v1818, %v1817
    %v1834 = vpack.c.b16 %v1820, %v1819
    %v1835 = vpack.c.b16 %v1822, %v1821
    %v1836 = vpack.c.b16 %v1824, %v1823
    %v1837 = vpack.c.b16 %v1826, %v1825
    %v1838 = vpack.c.b16 %v1828, %v1827
    %v1839 = vpack.c.b16 %v1830, %v1829
    %v1840 = vpack.c.b16 %v1832, %v1831
    %1849 = vmatprep.subr.bf16.mxu0 0
    %1850 = vmatpush1.bf16.msra.mxu0 %v1840
    %1851 = vmatprep.subr.bf16.mxu0 0
    %1852 = vmatpush1.bf16.msra.mxu0 %v1839
    %1853 = vmatprep.subr.bf16.mxu0 0
    %1854 = vmatpush1.bf16.msra.mxu0 %v1838
    %1855 = vmatprep.subr.bf16.mxu0 0
    %1856 = vmatpush1.bf16.msra.mxu0 %v1837
    %1857 = vmatprep.subr.bf16.mxu0 0
    %1858 = vmatpush1.bf16.msra.mxu0 %v1836
    %1859 = vmatprep.subr.bf16.mxu0 0
    %1860 = vmatpush1.bf16.msra.mxu0 %v1835
    %1861 = vmatprep.subr.bf16.mxu0 0
    %1862 = vmatpush1.bf16.msra.mxu0 %v1834
    %1863 = vmatprep.subr.bf16.mxu0 0
    %1864 = vmatpush1.bf16.msra.mxu0 %v1833
    %1865 = vmatprep.subr.bf16.mxu0 0
    %1866 = vmatpush2.bf16.msra.mxu0 0
    %1867 = vmatprep.subr.bf16.mxu0 0
    %1868 = vmatpush2.bf16.msra.mxu0 0
    %1869 = vmatprep.subr.bf16.mxu0 0
    %1870 = vmatpush2.bf16.msra.mxu0 0
    %1871 = vmatprep.subr.bf16.mxu0 0
    %1872 = vmatpush2.bf16.msra.mxu0 0
    %1873 = vmatprep.subr.bf16.mxu0 0
    %1874 = vmatpush2.bf16.msra.mxu0 0
    %1875 = vmatprep.subr.bf16.mxu0 0
    %1876 = vmatpush2.bf16.msra.mxu0 0
    %1877 = vmatprep.subr.bf16.mxu0 0
    %1878 = vmatpush2.bf16.msra.mxu0 0
    %1879 = vmatprep.subr.bf16.mxu0 0
    %1880 = vmatpush2.bf16.msra.mxu0 0
    %1881 = vmatprep.mubr.bf16.mxu0 0
    %1882 = vmatmul.mubr.bf16.gmra.mxu0 %v1783
    %v1883 = vpop.f32.mrf.mxu0
    %v1884 = vadd.f32 0.0, %v1883
    %v1885 = vpop.f32.mrf.mxu0
    %v1886 = vpop.f32.mrf.mxu0
    %v1887 = vadd.f32 0.0, %v1886
    %v1888 = vpop.f32.mrf.mxu0
    %1889 = vmatprep.mubr.bf16.mxu0 0
    %1890 = vmatmul.mubr.bf16.gmra.mxu0 %v1784
    %v1891 = vpop.f32.mrf.mxu0
    %v1892 = vadd.f32 0.0, %v1891
    %v1893 = vpop.f32.mrf.mxu0
    %v1894 = vpop.f32.mrf.mxu0
    %v1895 = vadd.f32 0.0, %v1894
    %v1896 = vpop.f32.mrf.mxu0
    %1897 = vdwg.mxu0
    %v1898 = vadd.f32 %v1589, %v1884
    %v1899 = vadd.f32 %v1590, %v1887
    %v1900 = vadd.f32 %v1591, %v1892
    %v1901 = vadd.f32 %v1592, %v1895
    %v1902 = vld [vmem:[%s21] sm:$0x1]
    %v1904 = vlaneseq
    %v1905 = vshrl.u32 %v1904, 7
    %v1906 = vsub.s32 0, %v1905
    %v1907 = vrot.slane %v1902, %v1906
    %v1909 = vadd.f32 %v1898, %v1907
    %v1910 = vadd.f32 %v1899, %v1907
    %v1911 = vadd.f32 %v1900, %v1907
    %v1912 = vadd.f32 %v1901, %v1907
    %v1913 = vld [vmem:[%s22] sm:$0x1]
    %v1914 = vld [vmem:[%s23] sm:$0x1]
    %v1915 = vsel %vm206, %v1909, 0.0
    %1916 = vadd.xlane.f32.xlu0 %v1915
    %v1917 = vpop.xlane.xlu0 %1916
    %v1918 = vsel %vm206, %v1910, 0.0
    %1919 = vadd.xlane.f32.xlu0 %v1918
    %v1920 = vpop.xlane.xlu0 %1919
    %v1921 = vsel %vm206, %v1911, 0.0
    %1922 = vadd.xlane.f32.xlu0 %v1921
    %v1923 = vpop.xlane.xlu0 %1922
    %v1924 = vsel %vm206, %v1912, 0.0
    %1925 = vadd.xlane.f32.xlu0 %v1924
    %v1926 = vpop.xlane.xlu0 %1925
    %v1927 = vmul.f32 %v1917, %v463
    %v1928 = vmul.f32 %v1920, %v463
    %v1929 = vmul.f32 %v1923, %v463
    %v1930 = vmul.f32 %v1926, %v463
    %v1931 = vsub.f32 %v1909, %v1927
    %v1932 = vsub.f32 %v1910, %v1928
    %v1933 = vsub.f32 %v1911, %v1929
    %v1934 = vsub.f32 %v1912, %v1930
    %v1935 = vmul.f32 %v1931, %v1931
    %v1936 = vmul.f32 %v1932, %v1932
    %v1937 = vmul.f32 %v1933, %v1933
    %v1938 = vmul.f32 %v1934, %v1934
    %v1939 = vsel %vm206, %v1935, 0.0
    %1940 = vadd.xlane.f32.xlu0 %v1939
    %v1941 = vpop.xlane.xlu0 %1940
    %v1942 = vsel %vm206, %v1936, 0.0
    %1943 = vadd.xlane.f32.xlu0 %v1942
    %v1944 = vpop.xlane.xlu0 %1943
    %v1945 = vsel %vm206, %v1937, 0.0
    %1946 = vadd.xlane.f32.xlu0 %v1945
    %v1947 = vpop.xlane.xlu0 %1946
    %v1948 = vsel %vm206, %v1938, 0.0
    %1949 = vadd.xlane.f32.xlu0 %v1948
    %v1950 = vpop.xlane.xlu0 %1949
    %v1951 = vmul.f32 %v1941, %v463
    %v1952 = vmul.f32 %v1944, %v463
    %v1953 = vmul.f32 %v1947, %v463
    %v1954 = vmul.f32 %v1950, %v463
    %v1955 = vadd.f32 %v1951, 1e-05
    %v1956 = vadd.f32 %v1952, 1e-05
    %v1957 = vadd.f32 %v1953, 1e-05
    %v1958 = vadd.f32 %v1954, 1e-05
    %v1959 = vrsqrt.pop %v1955
    %v1960 = vrsqrt.pop %v1956
    %v1961 = vrsqrt.pop %v1957
    %v1962 = vrsqrt.pop %v1958
    %v1963 = vmul.f32 %v1931, %v1959
    %v1964 = vmul.f32 %v1932, %v1960
    %v1965 = vmul.f32 %v1933, %v1961
    %v1966 = vmul.f32 %v1934, %v1962
    %v1968 = vlaneseq
    %v1969 = vshrl.u32 %v1968, 7
    %v1970 = vsub.s32 0, %v1969
    %v1971 = vrot.slane %v1913, %v1970
    %v1973 = vmul.f32 %v1963, %v1971
    %v1974 = vmul.f32 %v1964, %v1971
    %v1975 = vmul.f32 %v1965, %v1971
    %v1976 = vmul.f32 %v1966, %v1971
    %v1978 = vlaneseq
    %v1979 = vshrl.u32 %v1978, 7
    %v1980 = vsub.s32 0, %v1979
    %v1981 = vrot.slane %v1914, %v1980
    %v1983 = vadd.f32 %v1973, %v1981
    %v1984 = vadd.f32 %v1974, %v1981
    %v1985 = vadd.f32 %v1975, %v1981
    %v1986 = vadd.f32 %v1976, %v1981
    %v1987 = vpack.c.bf16 %v1984, %v1983
    %v1988 = vpack.c.bf16 %v1986, %v1985
    %v1989 = vld [vmem:[%s24] sm:$0xf]
    %v1990 = vld [vmem:[%s24 + $0x4] sm:$0xf]
    %v1991 = vld [vmem:[%s24 + $0x8] sm:$0xf]
    %v1992 = vld [vmem:[%s24 + $0xc] sm:$0xf]
    %v1993 = vld [vmem:[%s25] sm:$0x1]
    %v1995 = vlaneseq
    %v1996 = vshrl.u32 %v1995, 7
    %v1997 = vsub.s32 0, %v1996
    %v1998 = vrot.slane %v1993, %v1997
    %v2004 = vunpack.c.l.b16 %v1989
    %v2005 = vunpack.c.l.b16 %v1990
    %v2006 = vunpack.c.l.b16 %v1991
    %v2007 = vunpack.c.l.b16 %v1992
    %v2008 = vpack.c.b16 %v2005, %v2004
    %v2009 = vpack.c.b16 %v2007, %v2006
    %v2013 = vsel %vm206, %v1987, 0
    %v2016 = vsel %vm206, %v1988, 0
    %2018 = vmatprep.subr.bf16.mxu0 0
    %2019 = vmatpush1.bf16.msra.mxu0 0
    %2020 = vmatprep.subr.bf16.mxu0 0
    %2021 = vmatpush1.bf16.msra.mxu0 0
    %2022 = vmatprep.subr.bf16.mxu0 0
    %2023 = vmatpush1.bf16.msra.mxu0 0
    %2024 = vmatprep.subr.bf16.mxu0 0
    %2025 = vmatpush1.bf16.msra.mxu0 0
    %2026 = vmatprep.subr.bf16.mxu0 0
    %2027 = vmatpush1.bf16.msra.mxu0 0
    %2028 = vmatprep.subr.bf16.mxu0 0
    %2029 = vmatpush1.bf16.msra.mxu0 0
    %2030 = vmatprep.subr.bf16.mxu0 0
    %2031 = vmatpush1.bf16.msra.mxu0 %v2009
    %2032 = vmatprep.subr.bf16.mxu0 0
    %2033 = vmatpush1.bf16.msra.mxu0 %v2008
    %2034 = vmatprep.subr.bf16.mxu0 0
    %2035 = vmatpush2.bf16.msra.mxu0 0
    %2036 = vmatprep.subr.bf16.mxu0 0
    %2037 = vmatpush2.bf16.msra.mxu0 0
    %2038 = vmatprep.subr.bf16.mxu0 0
    %2039 = vmatpush2.bf16.msra.mxu0 0
    %2040 = vmatprep.subr.bf16.mxu0 0
    %2041 = vmatpush2.bf16.msra.mxu0 0
    %2042 = vmatprep.subr.bf16.mxu0 0
    %2043 = vmatpush2.bf16.msra.mxu0 0
    %2044 = vmatprep.subr.bf16.mxu0 0
    %2045 = vmatpush2.bf16.msra.mxu0 0
    %2046 = vmatprep.subr.bf16.mxu0 0
    %2047 = vmatpush2.bf16.msra.mxu0 0
    %2048 = vmatprep.subr.bf16.mxu0 0
    %2049 = vmatpush2.bf16.msra.mxu0 0
    %2050 = vmatprep.mubr.bf16.mxu0 0
    %2051 = vmatmul.mubr.bf16.gmra.mxu0 %v2013
    %v2052 = vpop.f32.mrf.mxu0
    %v2053 = vadd.f32 %v1998, %v2052
    %v2054 = vpop.f32.mrf.mxu0
    %v2055 = vpop.f32.mrf.mxu0
    %v2056 = vadd.f32 %v1998, %v2055
    %v2057 = vpop.f32.mrf.mxu0
    %2058 = vmatprep.mubr.bf16.mxu0 0
    %2059 = vmatmul.mubr.bf16.gmra.mxu0 %v2016
    %v2060 = vpop.f32.mrf.mxu0
    %v2061 = vadd.f32 %v1998, %v2060
    %v2062 = vpop.f32.mrf.mxu0
    %v2063 = vpop.f32.mrf.mxu0
    %v2064 = vadd.f32 %v1998, %v2063
    %v2065 = vpop.f32.mrf.mxu0
    %2066 = vdwg.mxu0
    %2067 = vst [vmem:[#allocation2] sm:$0xff] %v2053
    %2068 = vst [vmem:[#allocation2 + $0x8] sm:$0xff] %v2056
    %2069 = vst [vmem:[#allocation2 + $0x10] sm:$0xff] %v2061
    %2070 = vst [vmem:[#allocation2 + $0x18] sm:$0xff] %v2064
    // Predicated region
    $region106: #{maskgit_forward.3} parent=1 // pred_check
      _
    $region107: #{maskgit_forward.3} parent=1 // pred_check_branch
      %2072 = sbr.rel (0) target = $region109
    $region108: #{maskgit_forward.3} parent=1 // pred_region
      %s2074 = ssub.s32 512, 512
      %2075 = vsyncadd [#allocation3], %s2074
      %s2076 = sshll.u32 [#allocation2], 4
      %s2077 = int_to_ptr.vmem [resolvable:$true] %s2076
      %2082 = dma.vmem_to_hbm [thread:$0]  %s2077, 512, %s26, [#allocation3], 128, 128, 8
    $region109: #{maskgit_forward.3} parent=1 // pred_fallthru
      _
    // Predicated region
    $region110: #{maskgit_forward.3} parent=1 // pred_check
      _
    $region111: #{maskgit_forward.3} parent=1 // pred_check_branch
      %2084 = sbr.rel (0) target = $region113
    $region112: #{maskgit_forward.3} parent=1 // pred_region
      _
    $region113: #{maskgit_forward.3} parent=1 // pred_fallthru
      _
    // Predicated region
    $region114: #{maskgit_forward.3} parent=1 // pred_check
      _
    $region115: #{maskgit_forward.3} parent=1 // pred_check_branch
      %2086 = sbr.rel (0) target = $region117
    $region116: #{maskgit_forward.3} parent=1 // pred_region
      %2087 = dma.done [#allocation3], 512
    $region117: #{maskgit_forward.3} parent=1 // pred_fallthru
      _
    // Predicated region
    $region118: #{maskgit_forward.3} parent=1 // pred_check
      _
    $region119: #{maskgit_forward.3} parent=1 // pred_check_branch
      %2089 = sbr.rel (0) target = $region121
    $region120: #{maskgit_forward.3} parent=1 // pred_region
      _
    $region121: #{maskgit_forward.3} parent=1 // pred_fallthru
      _
    %2090 = vsyncpa [#allocation3], 1

</llo_original>
